<compile_context>
chip_gen: v7x
topology: tpu7x:2x2x1
jax: 0.10.0
libtpu: 0.0.40
codegen_flags: <defaults>
</compile_context>

<pallas_src>
import jax
import jax.numpy as jnp
from jax import lax
from jax.experimental import pallas as pl
from jax.experimental.pallas import tpu as pltpu


def make_attention_kernel(num_heads, head_dim, heads_per_step, q_block, n_q,
                          exp_dtype):
    C = num_heads * head_dim

    def kernel(xt_ref, wqkv_ref, wprojT_ref, bias_ref, o_ref, qkv_s, cat_s):
        hg = pl.program_id(1)            # head-group index (reduction axis)
        n_tok = xt_ref.shape[2]

        # qkv projection once per batch element (head-group 0), full MXU width
        # (3C, C) @ (C, N); result kept transposed so per-head q/k/v extraction
        # is a cheap sublane slice (pl.ds at multiples of head_dim).
        @pl.when(hg == 0)
        def _():
            qkv_s[...] = jnp.dot(
                wqkv_ref[...], xt_ref[0],
                preferred_element_type=jnp.float32).astype(jnp.bfloat16)

        # Ones row used to compute softmax denominators on the MXU with a
        # lane-oriented (1, q_blk) result (hoisted out of the loops).
        ones_row = jnp.ones((1, n_tok), dtype=jnp.bfloat16)

        for g in range(heads_per_step):              # statically unrolled heads
            base = hg * (heads_per_step * head_dim) + g * head_dim
            q_start = pl.multiple_of(base, head_dim)
            k_start = pl.multiple_of(C + base, head_dim)
            v_start = pl.multiple_of(2 * C + base, head_dim)

            qT = qkv_s[pl.ds(q_start, head_dim), :]   # (hd, N), scale pre-folded
            kT = qkv_s[pl.ds(k_start, head_dim), :]   # (hd, N)
            vT = qkv_s[pl.ds(v_start, head_dim), :]   # (hd, N)

            for qi in range(n_q):                     # statically unrolled q blocks
                q0 = qi * q_block
                qTb = qT[:, q0:q0 + q_block]          # (hd, q_blk)

                # scores: contract head_dim (sublane axis of both operands);
                # the lhs transpose is folded into the matmul dim-numbers --
                # no materialized qT.T.
                s = lax.dot_general(
                    qTb, kT, (((0,), (0,)), ((), ())),
                    preferred_element_type=jnp.float32)           # (q_blk, N)

                # numerically stable softmax; normalization deferred past P@V.
                m = jnp.max(s, axis=-1, keepdims=True)
                p = jnp.exp((s - m).astype(exp_dtype)).astype(jnp.bfloat16)
                # attn_drop p = 0.0 -> identity.

                # lane-oriented denominators via a tiny MXU matmul: (1, q_blk)
                denom = lax.dot_general(
                    ones_row, p, (((1,), (1,)), ((), ())),
                    preferred_element_type=jnp.float32)

                # o^T = V^T @ P^T : contract the kv axis of both operands, so
                # the result lands directly in the (hd, q_blk) concat layout.
                oT = lax.dot_general(
                    vT, p, (((1,), (1,)), ((), ())),
                    preferred_element_type=jnp.float32)           # (hd, q_blk)
                oT = oT * pl.reciprocal(denom, approx=True)       # deferred norm

                cat_s[pl.ds(q_start, head_dim), q0:q0 + q_block] = (
                    oT.astype(jnp.bfloat16))

        # Last head group: ONE output projection with full contraction K = C.
        @pl.when(hg == pl.num_programs(1) - 1)
        def _():
            out = lax.dot_general(
                cat_s[...], wprojT_ref[...], (((0,), (0,)), ((), ())),
                preferred_element_type=jnp.float32)               # (N, C)
            o_ref[0] = (out + bias_ref[...]).astype(o_ref.dtype)
            # proj_drop p = 0.0 -> identity.

    return kernel


def _tpu_kind():
    try:
        return jax.devices()[0].device_kind.lower()
    except Exception:
        return ""


def _pick_heads_per_step(num_heads):
    for g in (4, 2):
        if num_heads % g == 0:
            return g
    return 1


def _pick_q_block(n, cap=256):
    if n <= cap:
        return n
    for cand in (256, 192, 128, 64, 32, 16, 8):
        if cand <= cap and n % cand == 0:
            return cand
    return n   # TODO(synk): pad/mask ragged N with no friendly divisor.


def attention_pallas(x, w_qkv, w_proj, b_proj, num_heads, qk_scale=None):
    """Forward pass of the Attention module.

    x:      (B, N, C) float32  -- same layout as the PyTorch module.
    w_qkv:  (3C, C)   float32  -- nn.Linear(dim, 3*dim, bias=False).weight.
    w_proj: (C, C)    float32  -- nn.Linear(dim, dim).weight.
    b_proj: (C,)      float32  -- nn.Linear(dim, dim).bias.
    """
    B, N, C = x.shape
    assert C % num_heads == 0
    head_dim = C // num_heads
    scale = qk_scale if qk_scale is not None else head_dim ** (-0.5)

    kind = _tpu_kind()
    # bf16 VPU/EUP only on v6e/v7x; keep softmax math in f32 on v5e.
    exp_dtype = jnp.float32 if "v5" in kind else jnp.bfloat16
    # v7x has 64 MiB VMEM -> keep the conservative budget; 128 MiB on v5e/v6e.
    vmem_limit = (32 if "v7" in kind else 64) * 1024 * 1024

    heads_per_step = _pick_heads_per_step(num_heads)
    q_block = _pick_q_block(N)
    assert N % q_block == 0
    n_q = N // q_block

    # Host-side prep (plain XLA ops outside the kernel):
    #  * fold the softmax scale into the q rows of the qkv weight (zero cost)
    #  * cast MXU operands to bf16
    #  * transpose x to (B, C, N) so in-kernel head slicing is along sublanes
    #  * pre-transpose the proj weight to (C_in, C_out).
    scale_rows = jnp.concatenate(
        [jnp.full((C,), scale, jnp.float32), jnp.ones((2 * C,), jnp.float32)])
    w_qkv_scaled = (w_qkv * scale_rows[:, None]).astype(jnp.bfloat16)   # (3C, C)
    w_projT = w_proj.T.astype(jnp.bfloat16)                             # (C_in, C_out)
    bias = b_proj.reshape(1, C).astype(jnp.float32)
    x_t = jnp.swapaxes(x, 1, 2).astype(jnp.bfloat16)                    # (B, C, N)

    kernel = make_attention_kernel(num_heads, head_dim, heads_per_step,
                                   q_block, n_q, exp_dtype)

    return pl.pallas_call(
        kernel,
        out_shape=jax.ShapeDtypeStruct((B, N, C), x.dtype),
        grid_spec=pltpu.PrefetchScalarGridSpec(
            num_scalar_prefetch=0,
            grid=(B, num_heads // heads_per_step),
            in_specs=[
                # x^T tile for the current batch element (constant across hg).
                pl.BlockSpec((1, C, N), lambda b, hg: (b, 0, 0)),
                # Grid-invariant weights (constant index_map -> fetched once).
                # TODO(synk): single-buffer these (pipeline_mode=pl.Buffered(1))
                # on v7x to reclaim the duplicate resident-weight VMEM.
                pl.BlockSpec((3 * C, C), lambda b, hg: (0, 0)),
                pl.BlockSpec((C, C), lambda b, hg: (0, 0)),
                pl.BlockSpec((1, C), lambda b, hg: (0, 0)),
            ],
            # Output last dim is C: lane-dense for ViT-Base (C=768); the demo
            # C=64 necessarily uses masked stores (full-extent block).
            out_specs=pl.BlockSpec((1, N, C), lambda b, hg: (b, 0, 0)),
            scratch_shapes=[
                pltpu.VMEM((3 * C, N), jnp.bfloat16),   # qkv^T for current batch
                pltpu.VMEM((C, N), jnp.bfloat16),       # transposed head-concat
            ],
        ),
        compiler_params=pltpu.CompilerParams(
            dimension_semantics=("parallel", "arbitrary"),
            vmem_limit_bytes=vmem_limit,
        ),
    )(x_t, w_qkv_scaled, w_projT, bias)


def attention_reference(x, w_qkv, w_proj, b_proj, num_heads, qk_scale=None):
    """Plain-JAX f32 reference mirroring the PyTorch forward (dropout p=0)."""
    B, N, C = x.shape
    hd = C // num_heads
    scale = qk_scale if qk_scale is not None else hd ** (-0.5)
    qkv = x @ w_qkv.T                                                   # (B, N, 3C)
    qkv = qkv.reshape(B, N, 3, num_heads, hd).transpose(2, 0, 3, 1, 4)  # (3,B,H,N,hd)
    q, k, v = qkv[0], qkv[1], qkv[2]
    attn = jnp.einsum('bhqd,bhkd->bhqk', q, k) * scale
    attn = jax.nn.softmax(attn, axis=-1)
    out = jnp.einsum('bhqk,bhkd->bhqd', attn, v)
    out = out.transpose(0, 2, 1, 3).reshape(B, N, C)
    return out @ w_proj.T + b_proj


if __name__ == "__main__":
    # Small shapes consistent with the module: dim=C=64, num_heads=4
    # (head_dim=16), seq N=32, batch B=2.
    B, N, C, H = 2, 32, 64, 4

    key = jax.random.PRNGKey(0)
    kx, kq, kp, kb = jax.random.split(key, 4)

    x = jax.random.normal(kx, (B, N, C), dtype=jnp.float32)
    w_qkv = jax.random.normal(kq, (3 * C, C), dtype=jnp.float32) * 0.05  # qkv_bias=False
    w_proj = jax.random.normal(kp, (C, C), dtype=jnp.float32) * 0.05
    b_proj = jax.random.normal(kb, (C,), dtype=jnp.float32) * 0.05

    out = attention_pallas(x, w_qkv, w_proj, b_proj, num_heads=H)
    out = jax.block_until_ready(out)

    ref = attention_reference(x, w_qkv, w_proj, b_proj, num_heads=H)
    assert out.shape == (B, N, C)
    max_err = float(jnp.max(jnp.abs(out - ref)))
    # bf16 MXU operands + approx reciprocal -> loosened tolerance vs f32 ref.
    assert jnp.allclose(out, ref, atol=5e-2, rtol=5e-2), (
        f"mismatch vs reference (max|diff|={max_err})")

    print("KERNEL_OK")
</pallas_src>

<mosaic_0001>
module attributes {stable_mosaic.version = 11 : i64} {
  func.func @kernel(%arg0: i32, %arg1: i32, %arg2: memref<1x64x32xbf16, #tpu.memory_space<vmem>>, %arg3: memref<192x64xbf16, #tpu.memory_space<vmem>>, %arg4: memref<64x64xbf16, #tpu.memory_space<vmem>>, %arg5: memref<1x64xf32, #tpu.memory_space<vmem>>, %arg6: memref<1x32x64xf32, #tpu.memory_space<vmem>>, %arg7: memref<192x32xbf16, #tpu.memory_space<vmem>>, %arg8: memref<64x32xbf16, #tpu.memory_space<vmem>>) attributes {dimension_semantics = [#tpu.dimension_semantics<parallel>, #tpu.dimension_semantics<arbitrary>], iteration_bounds = array<i64: 2, 1>, scalar_prefetch = 0 : i64, scratch_operands = 2 : i64, tpu.core_type = #tpu.core_type<tc>, window_params = [{transform_indices = @transform_0, window_bounds = array<i64: 1, 64, 32>}, {pipeline_mode = #tpu.pipeline_mode<synchronous>, transform_indices = @transform_1, window_bounds = array<i64: 192, 64>}, {pipeline_mode = #tpu.pipeline_mode<synchronous>, transform_indices = @transform_2, window_bounds = array<i64: 64, 64>}, {pipeline_mode = #tpu.pipeline_mode<synchronous>, transform_indices = @transform_3, window_bounds = array<i64: 1, 64>}, {transform_indices = @transform_4, window_bounds = array<i64: 1, 32, 64>}]} {
    %c0_i32 = arith.constant 0 : i32
    %0 = arith.cmpi eq, %arg1, %c0_i32 : i32
    %1 = arith.extui %0 : i1 to i32
    %c0_i32_0 = arith.constant 0 : i32
    %2 = arith.cmpi ne, %1, %c0_i32_0 : i32
    scf.if %2 {
      %c0_45 = arith.constant 0 : index
      %c0_46 = arith.constant 0 : index
      %119 = vector.load %arg3[%c0_45, %c0_46] : memref<192x64xbf16, #tpu.memory_space<vmem>>, vector<192x64xbf16>
      %c0_47 = arith.constant 0 : index
      %c0_48 = arith.constant 0 : index
      %c0_49 = arith.constant 0 : index
      %120 = vector.load %arg2[%c0_47, %c0_48, %c0_49] : memref<1x64x32xbf16, #tpu.memory_space<vmem>>, vector<1x64x32xbf16>
      %121 = vector.shape_cast %120 : vector<1x64x32xbf16> to vector<64x32xbf16>
      %cst_50 = arith.constant dense<0.000000e+00> : vector<192x32xf32>
      %122 = tpu.matmul %119, %121, %cst_50 {dimension_numbers = #tpu.dot_dimension_numbers<[1], [0], [0], [1], [0, 0, 1, 1], [], []>} : vector<192x64xbf16>, vector<64x32xbf16>, vector<192x32xf32> -> vector<192x32xf32>
      %123 = arith.truncf %122 : vector<192x32xf32> to vector<192x32xbf16>
      %c0_51 = arith.constant 0 : index
      %c0_52 = arith.constant 0 : index
      %124 = vector.load %arg7[%c0_51, %c0_52] : memref<192x32xbf16, #tpu.memory_space<vmem>>, vector<192x32xbf16>
      tpu.vector_store %arg7[%c0_51, %c0_52], %123 {strides = array<i32>} : memref<192x32xbf16, #tpu.memory_space<vmem>>, vector<192x32xbf16>,
    } else {
    }
    %cst = arith.constant 1.000000e+00 : bf16
    %3 = vector.broadcast %cst : bf16 to vector<1x32xbf16>
    %c64_i32 = arith.constant 64 : i32
    %4 = arith.muli %arg1, %c64_i32 : i32
    %c0_i32_1 = arith.constant 0 : i32
    %5 = arith.addi %4, %c0_i32_1 : i32
    %6 = tpu.assume_multiple %5, 16 : i32
    %c64_i32_2 = arith.constant 64 : i32
    %7 = arith.addi %c64_i32_2, %5 : i32
    %8 = tpu.assume_multiple %7, 16 : i32
    %c128_i32 = arith.constant 128 : i32
    %9 = arith.addi %c128_i32, %5 : i32
    %10 = tpu.assume_multiple %9, 16 : i32
    %11 = arith.index_cast %6 : i32 to index
    %c0 = arith.constant 0 : index
    %12 = vector.load %arg7[%11, %c0] : memref<192x32xbf16, #tpu.memory_space<vmem>>, vector<16x32xbf16>
    %13 = arith.index_cast %8 : i32 to index
    %c0_3 = arith.constant 0 : index
    %14 = vector.load %arg7[%13, %c0_3] : memref<192x32xbf16, #tpu.memory_space<vmem>>, vector<16x32xbf16>
    %15 = arith.index_cast %10 : i32 to index
    %c0_4 = arith.constant 0 : index
    %16 = vector.load %arg7[%15, %c0_4] : memref<192x32xbf16, #tpu.memory_space<vmem>>, vector<16x32xbf16>
    %cst_5 = arith.constant dense<0.000000e+00> : vector<32x32xf32>
    %17 = tpu.matmul %12, %14, %cst_5 {dimension_numbers = #tpu.dot_dimension_numbers<[0], [0], [1], [1], [0, 1, 1, 1], [], []>} : vector<16x32xbf16>, vector<16x32xbf16>, vector<32x32xf32> -> vector<32x32xf32>
    %cst_6 = arith.constant dense<0xFF800000> : vector<32xf32>
    %18 = vector.multi_reduction <maximumf>, %17, %cst_6 [1] : vector<32x32xf32> to vector<32xf32>
    %19 = vector.shape_cast %18 : vector<32xf32> to vector<32x1xf32>
    %20 = vector.broadcast %19 : vector<32x1xf32> to vector<32x32xf32>
    %21 = arith.subf %17, %20 : vector<32x32xf32>
    %22 = arith.truncf %21 : vector<32x32xf32> to vector<32x32xbf16>
    %23 = math.exp %22 : vector<32x32xbf16>
    %cst_7 = arith.constant dense<0.000000e+00> : vector<1x32xf32>
    %24 = tpu.matmul %3, %23, %cst_7 {dimension_numbers = #tpu.dot_dimension_numbers<[1], [1], [0], [0], [0, 0, 1, 0], [], []>} : vector<1x32xbf16>, vector<32x32xbf16>, vector<1x32xf32> -> vector<1x32xf32>
    %cst_8 = arith.constant dense<0.000000e+00> : vector<16x32xf32>
    %25 = tpu.matmul %16, %23, %cst_8 {dimension_numbers = #tpu.dot_dimension_numbers<[1], [1], [0], [0], [0, 0, 1, 0], [], []>} : vector<16x32xbf16>, vector<32x32xbf16>, vector<16x32xf32> -> vector<16x32xf32>
    %26 = tpu.reciprocal %24 {approx = true} : vector<1x32xf32> -> vector<1x32xf32>
    %27 = vector.broadcast %26 : vector<1x32xf32> to vector<16x32xf32>
    %28 = arith.mulf %25, %27 : vector<16x32xf32>
    %29 = arith.truncf %28 : vector<16x32xf32> to vector<16x32xbf16>
    %30 = arith.index_cast %6 : i32 to index
    %c0_9 = arith.constant 0 : index
    %31 = vector.load %arg8[%30, %c0_9] : memref<64x32xbf16, #tpu.memory_space<vmem>>, vector<16x32xbf16>
    tpu.vector_store %arg8[%30, %c0_9], %29 {strides = array<i32>} : memref<64x32xbf16, #tpu.memory_space<vmem>>, vector<16x32xbf16>,
    %c64_i32_10 = arith.constant 64 : i32
    %32 = arith.muli %arg1, %c64_i32_10 : i32
    %c16_i32 = arith.constant 16 : i32
    %33 = arith.addi %32, %c16_i32 : i32
    %34 = tpu.assume_multiple %33, 16 : i32
    %c64_i32_11 = arith.constant 64 : i32
    %35 = arith.addi %c64_i32_11, %33 : i32
    %36 = tpu.assume_multiple %35, 16 : i32
    %c128_i32_12 = arith.constant 128 : i32
    %37 = arith.addi %c128_i32_12, %33 : i32
    %38 = tpu.assume_multiple %37, 16 : i32
    %39 = arith.index_cast %34 : i32 to index
    %c0_13 = arith.constant 0 : index
    %40 = vector.load %arg7[%39, %c0_13] : memref<192x32xbf16, #tpu.memory_space<vmem>>, vector<16x32xbf16>
    %41 = arith.index_cast %36 : i32 to index
    %c0_14 = arith.constant 0 : index
    %42 = vector.load %arg7[%41, %c0_14] : memref<192x32xbf16, #tpu.memory_space<vmem>>, vector<16x32xbf16>
    %43 = arith.index_cast %38 : i32 to index
    %c0_15 = arith.constant 0 : index
    %44 = vector.load %arg7[%43, %c0_15] : memref<192x32xbf16, #tpu.memory_space<vmem>>, vector<16x32xbf16>
    %cst_16 = arith.constant dense<0.000000e+00> : vector<32x32xf32>
    %45 = tpu.matmul %40, %42, %cst_16 {dimension_numbers = #tpu.dot_dimension_numbers<[0], [0], [1], [1], [0, 1, 1, 1], [], []>} : vector<16x32xbf16>, vector<16x32xbf16>, vector<32x32xf32> -> vector<32x32xf32>
    %cst_17 = arith.constant dense<0xFF800000> : vector<32xf32>
    %46 = vector.multi_reduction <maximumf>, %45, %cst_17 [1] : vector<32x32xf32> to vector<32xf32>
    %47 = vector.shape_cast %46 : vector<32xf32> to vector<32x1xf32>
    %48 = vector.broadcast %47 : vector<32x1xf32> to vector<32x32xf32>
    %49 = arith.subf %45, %48 : vector<32x32xf32>
    %50 = arith.truncf %49 : vector<32x32xf32> to vector<32x32xbf16>
    %51 = math.exp %50 : vector<32x32xbf16>
    %cst_18 = arith.constant dense<0.000000e+00> : vector<1x32xf32>
    %52 = tpu.matmul %3, %51, %cst_18 {dimension_numbers = #tpu.dot_dimension_numbers<[1], [1], [0], [0], [0, 0, 1, 0], [], []>} : vector<1x32xbf16>, vector<32x32xbf16>, vector<1x32xf32> -> vector<1x32xf32>
    %cst_19 = arith.constant dense<0.000000e+00> : vector<16x32xf32>
    %53 = tpu.matmul %44, %51, %cst_19 {dimension_numbers = #tpu.dot_dimension_numbers<[1], [1], [0], [0], [0, 0, 1, 0], [], []>} : vector<16x32xbf16>, vector<32x32xbf16>, vector<16x32xf32> -> vector<16x32xf32>
    %54 = tpu.reciprocal %52 {approx = true} : vector<1x32xf32> -> vector<1x32xf32>
    %55 = vector.broadcast %54 : vector<1x32xf32> to vector<16x32xf32>
    %56 = arith.mulf %53, %55 : vector<16x32xf32>
    %57 = arith.truncf %56 : vector<16x32xf32> to vector<16x32xbf16>
    %58 = arith.index_cast %34 : i32 to index
    %c0_20 = arith.constant 0 : index
    %59 = vector.load %arg8[%58, %c0_20] : memref<64x32xbf16, #tpu.memory_space<vmem>>, vector<16x32xbf16>
    tpu.vector_store %arg8[%58, %c0_20], %57 {strides = array<i32>} : memref<64x32xbf16, #tpu.memory_space<vmem>>, vector<16x32xbf16>,
    %c64_i32_21 = arith.constant 64 : i32
    %60 = arith.muli %arg1, %c64_i32_21 : i32
    %c32_i32 = arith.constant 32 : i32
    %61 = arith.addi %60, %c32_i32 : i32
    %62 = tpu.assume_multiple %61, 16 : i32
    %c64_i32_22 = arith.constant 64 : i32
    %63 = arith.addi %c64_i32_22, %61 : i32
    %64 = tpu.assume_multiple %63, 16 : i32
    %c128_i32_23 = arith.constant 128 : i32
    %65 = arith.addi %c128_i32_23, %61 : i32
    %66 = tpu.assume_multiple %65, 16 : i32
    %67 = arith.index_cast %62 : i32 to index
    %c0_24 = arith.constant 0 : index
    %68 = vector.load %arg7[%67, %c0_24] : memref<192x32xbf16, #tpu.memory_space<vmem>>, vector<16x32xbf16>
    %69 = arith.index_cast %64 : i32 to index
    %c0_25 = arith.constant 0 : index
    %70 = vector.load %arg7[%69, %c0_25] : memref<192x32xbf16, #tpu.memory_space<vmem>>, vector<16x32xbf16>
    %71 = arith.index_cast %66 : i32 to index
    %c0_26 = arith.constant 0 : index
    %72 = vector.load %arg7[%71, %c0_26] : memref<192x32xbf16, #tpu.memory_space<vmem>>, vector<16x32xbf16>
    %cst_27 = arith.constant dense<0.000000e+00> : vector<32x32xf32>
    %73 = tpu.matmul %68, %70, %cst_27 {dimension_numbers = #tpu.dot_dimension_numbers<[0], [0], [1], [1], [0, 1, 1, 1], [], []>} : vector<16x32xbf16>, vector<16x32xbf16>, vector<32x32xf32> -> vector<32x32xf32>
    %cst_28 = arith.constant dense<0xFF800000> : vector<32xf32>
    %74 = vector.multi_reduction <maximumf>, %73, %cst_28 [1] : vector<32x32xf32> to vector<32xf32>
    %75 = vector.shape_cast %74 : vector<32xf32> to vector<32x1xf32>
    %76 = vector.broadcast %75 : vector<32x1xf32> to vector<32x32xf32>
    %77 = arith.subf %73, %76 : vector<32x32xf32>
    %78 = arith.truncf %77 : vector<32x32xf32> to vector<32x32xbf16>
    %79 = math.exp %78 : vector<32x32xbf16>
    %cst_29 = arith.constant dense<0.000000e+00> : vector<1x32xf32>
    %80 = tpu.matmul %3, %79, %cst_29 {dimension_numbers = #tpu.dot_dimension_numbers<[1], [1], [0], [0], [0, 0, 1, 0], [], []>} : vector<1x32xbf16>, vector<32x32xbf16>, vector<1x32xf32> -> vector<1x32xf32>
    %cst_30 = arith.constant dense<0.000000e+00> : vector<16x32xf32>
    %81 = tpu.matmul %72, %79, %cst_30 {dimension_numbers = #tpu.dot_dimension_numbers<[1], [1], [0], [0], [0, 0, 1, 0], [], []>} : vector<16x32xbf16>, vector<32x32xbf16>, vector<16x32xf32> -> vector<16x32xf32>
    %82 = tpu.reciprocal %80 {approx = true} : vector<1x32xf32> -> vector<1x32xf32>
    %83 = vector.broadcast %82 : vector<1x32xf32> to vector<16x32xf32>
    %84 = arith.mulf %81, %83 : vector<16x32xf32>
    %85 = arith.truncf %84 : vector<16x32xf32> to vector<16x32xbf16>
    %86 = arith.index_cast %62 : i32 to index
    %c0_31 = arith.constant 0 : index
    %87 = vector.load %arg8[%86, %c0_31] : memref<64x32xbf16, #tpu.memory_space<vmem>>, vector<16x32xbf16>
    tpu.vector_store %arg8[%86, %c0_31], %85 {strides = array<i32>} : memref<64x32xbf16, #tpu.memory_space<vmem>>, vector<16x32xbf16>,
    %c64_i32_32 = arith.constant 64 : i32
    %88 = arith.muli %arg1, %c64_i32_32 : i32
    %c48_i32 = arith.constant 48 : i32
    %89 = arith.addi %88, %c48_i32 : i32
    %90 = tpu.assume_multiple %89, 16 : i32
    %c64_i32_33 = arith.constant 64 : i32
    %91 = arith.addi %c64_i32_33, %89 : i32
    %92 = tpu.assume_multiple %91, 16 : i32
    %c128_i32_34 = arith.constant 128 : i32
    %93 = arith.addi %c128_i32_34, %89 : i32
    %94 = tpu.assume_multiple %93, 16 : i32
    %95 = arith.index_cast %90 : i32 to index
    %c0_35 = arith.constant 0 : index
    %96 = vector.load %arg7[%95, %c0_35] : memref<192x32xbf16, #tpu.memory_space<vmem>>, vector<16x32xbf16>
    %97 = arith.index_cast %92 : i32 to index
    %c0_36 = arith.constant 0 : index
    %98 = vector.load %arg7[%97, %c0_36] : memref<192x32xbf16, #tpu.memory_space<vmem>>, vector<16x32xbf16>
    %99 = arith.index_cast %94 : i32 to index
    %c0_37 = arith.constant 0 : index
    %100 = vector.load %arg7[%99, %c0_37] : memref<192x32xbf16, #tpu.memory_space<vmem>>, vector<16x32xbf16>
    %cst_38 = arith.constant dense<0.000000e+00> : vector<32x32xf32>
    %101 = tpu.matmul %96, %98, %cst_38 {dimension_numbers = #tpu.dot_dimension_numbers<[0], [0], [1], [1], [0, 1, 1, 1], [], []>} : vector<16x32xbf16>, vector<16x32xbf16>, vector<32x32xf32> -> vector<32x32xf32>
    %cst_39 = arith.constant dense<0xFF800000> : vector<32xf32>
    %102 = vector.multi_reduction <maximumf>, %101, %cst_39 [1] : vector<32x32xf32> to vector<32xf32>
    %103 = vector.shape_cast %102 : vector<32xf32> to vector<32x1xf32>
    %104 = vector.broadcast %103 : vector<32x1xf32> to vector<32x32xf32>
    %105 = arith.subf %101, %104 : vector<32x32xf32>
    %106 = arith.truncf %105 : vector<32x32xf32> to vector<32x32xbf16>
    %107 = math.exp %106 : vector<32x32xbf16>
    %cst_40 = arith.constant dense<0.000000e+00> : vector<1x32xf32>
    %108 = tpu.matmul %3, %107, %cst_40 {dimension_numbers = #tpu.dot_dimension_numbers<[1], [1], [0], [0], [0, 0, 1, 0], [], []>} : vector<1x32xbf16>, vector<32x32xbf16>, vector<1x32xf32> -> vector<1x32xf32>
    %cst_41 = arith.constant dense<0.000000e+00> : vector<16x32xf32>
    %109 = tpu.matmul %100, %107, %cst_41 {dimension_numbers = #tpu.dot_dimension_numbers<[1], [1], [0], [0], [0, 0, 1, 0], [], []>} : vector<16x32xbf16>, vector<32x32xbf16>, vector<16x32xf32> -> vector<16x32xf32>
    %110 = tpu.reciprocal %108 {approx = true} : vector<1x32xf32> -> vector<1x32xf32>
    %111 = vector.broadcast %110 : vector<1x32xf32> to vector<16x32xf32>
    %112 = arith.mulf %109, %111 : vector<16x32xf32>
    %113 = arith.truncf %112 : vector<16x32xf32> to vector<16x32xbf16>
    %114 = arith.index_cast %90 : i32 to index
    %c0_42 = arith.constant 0 : index
    %115 = vector.load %arg8[%114, %c0_42] : memref<64x32xbf16, #tpu.memory_space<vmem>>, vector<16x32xbf16>
    tpu.vector_store %arg8[%114, %c0_42], %113 {strides = array<i32>} : memref<64x32xbf16, #tpu.memory_space<vmem>>, vector<16x32xbf16>,
    %c0_i32_43 = arith.constant 0 : i32
    %116 = arith.cmpi eq, %arg1, %c0_i32_43 : i32
    %117 = arith.extui %116 : i1 to i32
    %c0_i32_44 = arith.constant 0 : i32
    %118 = arith.cmpi ne, %117, %c0_i32_44 : i32
    scf.if %118 {
      %c0_45 = arith.constant 0 : index
      %c0_46 = arith.constant 0 : index
      %119 = vector.load %arg8[%c0_45, %c0_46] : memref<64x32xbf16, #tpu.memory_space<vmem>>, vector<64x32xbf16>
      %c0_47 = arith.constant 0 : index
      %c0_48 = arith.constant 0 : index
      %120 = vector.load %arg4[%c0_47, %c0_48] : memref<64x64xbf16, #tpu.memory_space<vmem>>, vector<64x64xbf16>
      %cst_49 = arith.constant dense<0.000000e+00> : vector<32x64xf32>
      %121 = tpu.matmul %119, %120, %cst_49 {dimension_numbers = #tpu.dot_dimension_numbers<[0], [0], [1], [1], [0, 1, 1, 1], [], []>} : vector<64x32xbf16>, vector<64x64xbf16>, vector<32x64xf32> -> vector<32x64xf32>
      %c0_50 = arith.constant 0 : index
      %c0_51 = arith.constant 0 : index
      %122 = vector.load %arg5[%c0_50, %c0_51] : memref<1x64xf32, #tpu.memory_space<vmem>>, vector<1x64xf32>
      %123 = vector.broadcast %122 : vector<1x64xf32> to vector<32x64xf32>
      %124 = arith.addf %121, %123 : vector<32x64xf32>
      %c0_52 = arith.constant 0 : index
      %c0_53 = arith.constant 0 : index
      %c0_54 = arith.constant 0 : index
      %125 = vector.load %arg6[%c0_52, %c0_53, %c0_54] : memref<1x32x64xf32, #tpu.memory_space<vmem>>, vector<1x32x64xf32>
      %126 = vector.shape_cast %125 : vector<1x32x64xf32> to vector<32x64xf32>
      %127 = vector.shape_cast %124 : vector<32x64xf32> to vector<1x32x64xf32>
      tpu.vector_store %arg6[%c0_52, %c0_53, %c0_54], %127 {strides = array<i32>} : memref<1x32x64xf32, #tpu.memory_space<vmem>>, vector<1x32x64xf32>,
    } else {
    }
    return
  }
  func.func @transform_0(%arg0: i32, %arg1: i32) -> (i32, i32, i32) {
    %c0_i32 = arith.constant 0 : i32
    %c0_i32_0 = arith.constant 0 : i32
    %c0_i32_1 = arith.constant 0 : i32
    return %arg0, %c0_i32, %c0_i32_0 : i32, i32, i32
  }
  func.func @transform_1(%arg0: i32, %arg1: i32) -> (i32, i32) {
    %c0_i32 = arith.constant 0 : i32
    %c0_i32_0 = arith.constant 0 : i32
    %c0_i32_1 = arith.constant 0 : i32
    return %c0_i32, %c0_i32_0 : i32, i32
  }
  func.func @transform_2(%arg0: i32, %arg1: i32) -> (i32, i32) {
    %c0_i32 = arith.constant 0 : i32
    %c0_i32_0 = arith.constant 0 : i32
    %c0_i32_1 = arith.constant 0 : i32
    return %c0_i32, %c0_i32_0 : i32, i32
  }
  func.func @transform_3(%arg0: i32, %arg1: i32) -> (i32, i32) {
    %c0_i32 = arith.constant 0 : i32
    %c0_i32_0 = arith.constant 0 : i32
    %c0_i32_1 = arith.constant 0 : i32
    return %c0_i32, %c0_i32_0 : i32, i32
  }
  func.func @transform_4(%arg0: i32, %arg1: i32) -> (i32, i32, i32) {
    %c0_i32 = arith.constant 0 : i32
    %c0_i32_0 = arith.constant 0 : i32
    %c0_i32_1 = arith.constant 0 : i32
    return %arg0, %c0_i32, %c0_i32_0 : i32, i32, i32
  }
}

</mosaic_0001>

<llo_original>
// kernel: tpu_custom_call.1
$region0: #{tpu_custom_call.1}
  #allocation0 [shape = 'u32[]', space=smem, size = 0x4, offset = 0x4, fixed_abs, tag = 'smem constant byte address 0x4 - core index']
  #allocation1 [shape = 'u32[144,128]{1,0:T(1,128)}', space=vmem, size = 0x12000, scoped, tag = 'internal scratch']
  #allocation2 [shape = 'bf16[192,32]{1,0:T(16,128)(2,1)}', space=vmem, size = 0xc000, scoped, tag = 'scratch operand']
  #allocation3 [shape = 'bf16[64,32]{1,0:T(16,128)(2,1)}', space=vmem, size = 0x4000, scoped, tag = 'scratch operand']
  %s0 = inlined_call_operand.hbm [shape: bf16[2,64,32], index: 0, kind: input, shape index: {}]
  %s1 = inlined_call_operand.hbm [shape: bf16[192,64], index: 1, kind: input, shape index: {}]
  %s2 = inlined_call_operand.hbm [shape: bf16[64,64], index: 2, kind: input, shape index: {}]
  %s3 = inlined_call_operand.hbm [shape: f32[1,64], index: 3, kind: input, shape index: {}]
  %s4 = inlined_call_operand.hbm [shape: f32[2,32,64], index: 4, kind: output, shape index: {}]
  %s5 = sld [smem:[#allocation0]]
  $region73: #{tpu_custom_call.1} parent=0
    _
  %s7 = ssub.s32 1, %s5
  %s8 = scalar_select 0, %s7, %s5
  $region1: #{tpu_custom_call.1} parent=0
    #allocation4 [shape = 'u8[32768]{0}', space=vmem, size = 0x8000, scoped, tag = 'input window, operand 0']
    #allocation5 [shape = 's32[2]{0}', space=sflag, size = 0x8, scoped, tag = 'scoped memory for tpu_custom_call.1']
    #allocation6 [shape = 's32[2]{0}', space=sflag, size = 0x8, scoped, tag = 'scoped memory for tpu_custom_call.1']
    #allocation7 [shape = 'u8[49152]{0}', space=vmem, size = 0xc000, scoped, tag = 'input window, operand 1, single buffered']
    #allocation8 [shape = 's32[1]{0}', space=sflag, size = 0x4, scoped, tag = 'scoped memory for tpu_custom_call.1']
    #allocation9 [shape = 'u8[16384]{0}', space=vmem, size = 0x4000, scoped, tag = 'input window, operand 2, single buffered']
    #allocation10 [shape = 'u8[512]{0}', space=vmem, size = 0x400, scoped, tag = 'input window, operand 3, single buffered']
    #allocation11 [shape = 's32[1]{0}', space=sflag, size = 0x4, scoped, tag = 'scoped memory for tpu_custom_call.1']
    #allocation12 [shape = 'u8[32768]{0}', space=vmem, size = 0x8000, scoped, tag = 'output window, operand 0']
    %9 = vsyncpa [#allocation5], 0
    %s10 = scalar_lea.sflag [#allocation5], 1
    %11 = vsyncpa %s10, 0
    %12 = vsyncpa [#allocation8], 0
    %13 = vsyncpa [#allocation11], 0
    %14 = vsyncpa [#allocation6], 0
    %s15 = scalar_lea.sflag [#allocation6], 1
    %16 = vsyncpa %s15, 0
    loop: start=0, step=1, limit=4
    $region2: #{tpu_custom_call.1} parent=1 // loop_pre_header
      _
    $region3: #{tpu_custom_call.1} parent=1 // loop_header
      %s18 = sphi 0, %s22
      %p19 = scmp.ge.s32.totalorder %s18, 4
      %s25 = sphi 0, %s37
      %s26 = sphi 0, %s33
      %s27 = sphi 0, %s25
      %s28 = sphi 0, %s26
      %s29 = sphi 0, %s27
      %s30 = sphi 0, %s28
      %s40 = sphi 0, %s42
      %s43 = sphi 0, %s40
      %s44 = sphi 0, %s43
      %s60 = sphi 0, %s44
      %s64 = sphi 0, %s64
      %s66 = sphi 0, %s64
      %s67 = sphi 0, %s66
      %s81 = sphi 0, %s67
      %s85 = sphi 0, %s85
      %s87 = sphi 0, %s85
      %s88 = sphi 0, %s87
      %s102 = sphi 0, %s88
      %s106 = sphi 0, %s106
      %s108 = sphi 0, %s106
      %s109 = sphi 0, %s108
      %s123 = sphi 0, %s109
      %s129 = sphi 0, %s131
      %s132 = sphi 0, %s129
      %s133 = sphi 0, %s132
      %s149 = sphi 0, %s133
    $region4: #{tpu_custom_call.1} parent=1 // loop_header_branch
      %21 = sbr.rel (%p19) target = $region8
    $region5: #{tpu_custom_call.1} parent=1 // loop_body
      %s23 = ssub.s32 %s18, 1
      %s24 = ssub.s32 %s18, 2
      %s31 = sadd.s32 1, %s26
      %p32 = scmp.ge.s32.totalorder %s31, 1
      %s33 = scalar_select %p32, 0, %s31
      %s34 = sadd.s32 1, %s25
      %s35 = scalar_select %p32, %s34, %s25
      %p36 = scmp.ge.s32.totalorder %s35, 2
      %s37 = scalar_select %p36, 0, %s35
      %s38 = ssub.s32 %s25, %s37
      %p39 = scmp.eq.s32.totalorder %s38, 0
      %s41 = sadd.s32 %s40, 1
      %s42 = scalar_select %p39, %s40, %s41
      %p45 = pneg %p39
      %p46 = scmp.eq.s32.totalorder %s18, 1
      %p47 = por %p45, %p46
      %p48 = scmp.ne.s32.totalorder %s40, %s43
      %p49 = scmp.eq.s32.totalorder %s18, 0
      %p50 = por %p48, %p49
      %p51 = scmp.ne.s32.totalorder %s40, %s43
      %p52 = scmp.eq.s32.totalorder %s23, 1
      %p53 = por %p51, %p52
      %p54 = scmp.ne.s32.totalorder %s43, %s44
      %p55 = scmp.eq.s32.totalorder %s23, 0
      %p56 = por %p54, %p55
      %p57 = scmp.ne.s32.totalorder %s43, %s44
      %p58 = scmp.eq.s32.totalorder %s24, 1
      %p59 = por %p57, %p58
      %p61 = scmp.ne.s32.totalorder %s44, %s60
      %p62 = scmp.eq.s32.totalorder %s24, 0
      %p63 = por %p61, %p62
      %s65 = sadd.s32 %s64, 1
      %p68 = scmp.eq.s32.totalorder %s18, 1
      %p69 = scmp.ne.s32.totalorder %s64, %s66
      %p70 = scmp.eq.s32.totalorder %s18, 0
      %p71 = por %p69, %p70
      %p72 = scmp.ne.s32.totalorder %s64, %s66
      %p73 = scmp.eq.s32.totalorder %s23, 1
      %p74 = por %p72, %p73
      %p75 = scmp.ne.s32.totalorder %s66, %s67
      %p76 = scmp.eq.s32.totalorder %s23, 0
      %p77 = por %p75, %p76
      %p78 = scmp.ne.s32.totalorder %s66, %s67
      %p79 = scmp.eq.s32.totalorder %s24, 1
      %p80 = por %p78, %p79
      %p82 = scmp.ne.s32.totalorder %s67, %s81
      %p83 = scmp.eq.s32.totalorder %s24, 0
      %p84 = por %p82, %p83
      %s86 = sadd.s32 %s85, 1
      %p89 = scmp.eq.s32.totalorder %s18, 1
      %p90 = scmp.ne.s32.totalorder %s85, %s87
      %p91 = scmp.eq.s32.totalorder %s18, 0
      %p92 = por %p90, %p91
      %p93 = scmp.ne.s32.totalorder %s85, %s87
      %p94 = scmp.eq.s32.totalorder %s23, 1
      %p95 = por %p93, %p94
      %p96 = scmp.ne.s32.totalorder %s87, %s88
      %p97 = scmp.eq.s32.totalorder %s23, 0
      %p98 = por %p96, %p97
      %p99 = scmp.ne.s32.totalorder %s87, %s88
      %p100 = scmp.eq.s32.totalorder %s24, 1
      %p101 = por %p99, %p100
      %p103 = scmp.ne.s32.totalorder %s88, %s102
      %p104 = scmp.eq.s32.totalorder %s24, 0
      %p105 = por %p103, %p104
      %s107 = sadd.s32 %s106, 1
      %p110 = scmp.eq.s32.totalorder %s18, 1
      %p111 = scmp.ne.s32.totalorder %s106, %s108
      %p112 = scmp.eq.s32.totalorder %s18, 0
      %p113 = por %p111, %p112
      %p114 = scmp.ne.s32.totalorder %s106, %s108
      %p115 = scmp.eq.s32.totalorder %s23, 1
      %p116 = por %p114, %p115
      %p117 = scmp.ne.s32.totalorder %s108, %s109
      %p118 = scmp.eq.s32.totalorder %s23, 0
      %p119 = por %p117, %p118
      %p120 = scmp.ne.s32.totalorder %s108, %s109
      %p121 = scmp.eq.s32.totalorder %s24, 1
      %p122 = por %p120, %p121
      %p124 = scmp.ne.s32.totalorder %s109, %s123
      %p125 = scmp.eq.s32.totalorder %s24, 0
      %p126 = por %p124, %p125
      %s127 = ssub.s32 %s25, %s37
      %p128 = scmp.eq.s32.totalorder %s127, 0
      %s130 = sadd.s32 %s129, 1
      %s131 = scalar_select %p128, %s129, %s130
      %p134 = pneg %p128
      %p135 = scmp.eq.s32.totalorder %s18, 1
      %p136 = por %p134, %p135
      %p137 = scmp.ne.s32.totalorder %s129, %s132
      %p138 = scmp.eq.s32.totalorder %s18, 0
      %p139 = por %p137, %p138
      %p140 = scmp.ne.s32.totalorder %s129, %s132
      %p141 = scmp.eq.s32.totalorder %s23, 1
      %p142 = por %p140, %p141
      %p143 = scmp.ne.s32.totalorder %s132, %s133
      %p144 = scmp.eq.s32.totalorder %s23, 0
      %p145 = por %p143, %p144
      %p146 = scmp.ne.s32.totalorder %s132, %s133
      %p147 = scmp.eq.s32.totalorder %s24, 1
      %p148 = por %p146, %p147
      %p150 = scmp.ne.s32.totalorder %s133, %s149
      %p151 = scmp.eq.s32.totalorder %s24, 0
      %p152 = por %p150, %p151
      %p153 = scmp.le.s32.totalorder 1, %s18
      %p154 = scmp.lt.s32.totalorder %s18, 3
      %p155 = pnand %p153, %p154
      %p156 = pneg %p155
      // Predicated region
      $region9: #{tpu_custom_call.1} parent=5 // pred_check
        _
      $region10: #{tpu_custom_call.1} parent=5 // pred_check_branch
        %158 = sbr.rel (%p155) target = $region12
      $region11: #{tpu_custom_call.1} parent=5 // pred_region
        %s159 = ssub.s32 %s18, 1
        // Predicated region
        $region13: #{tpu_custom_call.1} parent=11 // pred_check
          %p160 = pneg %p77
        $region14: #{tpu_custom_call.1} parent=11 // pred_check_branch
          %162 = sbr.rel (%p160) target = $region16
        $region15: #{tpu_custom_call.1} parent=11 // pred_region
          %s164 = ssub.s32 1536, 1536
          %165 = vsyncadd [#allocation8], %s164
          %s166 = sshll.u32 [#allocation7], 4
          %s167 = int_to_ptr.vmem [resolvable:$true] %s166
          %172 = dma.hbm_to_vmem [thread:$0]  %s1, 1536, %s167, [#allocation8], 64, 64, 4
        $region16: #{tpu_custom_call.1} parent=11 // pred_fallthru
          _
        // Predicated region
        $region17: #{tpu_custom_call.1} parent=11 // pred_check
          %p173 = pneg %p98
        $region18: #{tpu_custom_call.1} parent=11 // pred_check_branch
          %175 = sbr.rel (%p173) target = $region20
        $region19: #{tpu_custom_call.1} parent=11 // pred_region
          %s177 = ssub.s32 512, 512
          %178 = vsyncadd [#allocation8], %s177
          %s179 = sshll.u32 [#allocation9], 4
          %s180 = int_to_ptr.vmem [resolvable:$true] %s179
          %185 = dma.hbm_to_vmem [thread:$0]  %s2, 512, %s180, [#allocation8], 64, 64, 4
        $region20: #{tpu_custom_call.1} parent=11 // pred_fallthru
          _
        // Predicated region
        $region21: #{tpu_custom_call.1} parent=11 // pred_check
          %p186 = pneg %p119
        $region22: #{tpu_custom_call.1} parent=11 // pred_check_branch
          %188 = sbr.rel (%p186) target = $region24
        $region23: #{tpu_custom_call.1} parent=11 // pred_region
          %s190 = ssub.s32 16, 16
          %191 = vsyncadd [#allocation11], %s190
          %s193 = sshll.u32 [#allocation10], 4
          %s194 = int_to_ptr.vmem [resolvable:$true] %s193
          %196 = dma.hbm_to_vmem [thread:$0]  %s3, 16, %s194, [#allocation11]
        $region24: #{tpu_custom_call.1} parent=11 // pred_fallthru
          _
      $region12: #{tpu_custom_call.1} parent=5 // pred_fallthru
        _
      %p197 = scmp.lt.s32.totalorder %s18, 2
      // Predicated region
      $region25: #{tpu_custom_call.1} parent=5 // pred_check
        %p198 = pneg %p197
      $region26: #{tpu_custom_call.1} parent=5 // pred_check_branch
        %200 = sbr.rel (%p198) target = $region28
      $region27: #{tpu_custom_call.1} parent=5 // pred_region
        // Predicated region
        $region29: #{tpu_custom_call.1} parent=27 // pred_check
          %p201 = pneg %p50
        $region30: #{tpu_custom_call.1} parent=27 // pred_check_branch
          %203 = sbr.rel (%p201) target = $region32
        $region31: #{tpu_custom_call.1} parent=27 // pred_region
          %s204 = sand.u32 %s40, 1
          %s205 = scalar_lea.sflag [#allocation5], %s204
          %s206 = sand.u32 %s40, 1
          %s207 = smul.addr %s206, 32
          %s208 = scalar_lea.vmem [#allocation4], %s207
          %s210 = ssub.s32 512, 512
          %211 = vsyncadd %s205, %s210
          %s212 = smul.addr %s25, 8
          %s213 = smul.addr %s212, 64
          %s214 = scalar_lea.hbm %s0, %s213
          %s215 = sshll.u32 %s208, 4
          %s216 = int_to_ptr.vmem [resolvable:$true] %s215
          %221 = dma.hbm_to_vmem [thread:$0]  %s214, 512, %s216, %s205, 64, 64, 4
        $region32: #{tpu_custom_call.1} parent=27 // pred_fallthru
          _
      $region28: #{tpu_custom_call.1} parent=5 // pred_fallthru
        _
      %p222 = scmp.le.s32.totalorder 1, %s18
      %p223 = scmp.lt.s32.totalorder %s18, 3
      %p224 = pnand %p222, %p223
      %p225 = pneg %p224
      // Predicated region
      $region33: #{tpu_custom_call.1} parent=5 // pred_check
        _
      $region34: #{tpu_custom_call.1} parent=5 // pred_check_branch
        %227 = sbr.rel (%p224) target = $region36
      $region35: #{tpu_custom_call.1} parent=5 // pred_region
        %s228 = ssub.s32 %s18, 1
        %s229 = sand.u32 %s43, 1
        %s230 = scalar_lea.sflag [#allocation5], %s229
        %s231 = sand.u32 %s43, 1
        %s232 = smul.addr %s231, 32
        %s233 = scalar_lea.vmem [#allocation4], %s232
        // Predicated region
        $region37: #{tpu_custom_call.1} parent=35 // pred_check
          %p234 = pneg %p56
        $region38: #{tpu_custom_call.1} parent=35 // pred_check_branch
          %236 = sbr.rel (%p234) target = $region40
        $region39: #{tpu_custom_call.1} parent=35 // pred_region
          %237 = dma.done %s230, 512
        $region40: #{tpu_custom_call.1} parent=35 // pred_fallthru
          _
        // Predicated region
        $region41: #{tpu_custom_call.1} parent=35 // pred_check
          %p238 = pneg %p77
        $region42: #{tpu_custom_call.1} parent=35 // pred_check_branch
          %240 = sbr.rel (%p238) target = $region44
        $region43: #{tpu_custom_call.1} parent=35 // pred_region
          %241 = dma.done [#allocation8], 1536
        $region44: #{tpu_custom_call.1} parent=35 // pred_fallthru
          _
        // Predicated region
        $region45: #{tpu_custom_call.1} parent=35 // pred_check
          %p242 = pneg %p98
        $region46: #{tpu_custom_call.1} parent=35 // pred_check_branch
          %244 = sbr.rel (%p242) target = $region48
        $region47: #{tpu_custom_call.1} parent=35 // pred_region
          %245 = dma.done [#allocation8], 512
        $region48: #{tpu_custom_call.1} parent=35 // pred_fallthru
          _
        // Predicated region
        $region49: #{tpu_custom_call.1} parent=35 // pred_check
          %p246 = pneg %p119
        $region50: #{tpu_custom_call.1} parent=35 // pred_check_branch
          %248 = sbr.rel (%p246) target = $region52
        $region51: #{tpu_custom_call.1} parent=35 // pred_region
          %249 = dma.done [#allocation11], 16
        $region52: #{tpu_custom_call.1} parent=35 // pred_fallthru
          _
        %s250 = sand.u32 %s43, 1
        %s251 = scalar_lea.sflag [#allocation5], %s250
        %s252 = sand.u32 %s43, 1
        %s253 = smul.addr %s252, 32
        %s254 = scalar_lea.vmem [#allocation4], %s253
        %p255 = pneg %p56
        %p256 = pneg %p53
        %p257 = pneg %p77
        %p258 = pneg %p74
        %p259 = pneg %p98
        %p260 = pneg %p95
        %p261 = pneg %p119
        %p262 = pneg %p116
        %p263 = pneg %p145
        %p264 = pneg %p142
        %s265 = sand.u32 %s132, 1
        %s266 = scalar_lea.sflag [#allocation6], %s265
        %s267 = sand.u32 %s132, 1
        %s268 = smul.addr %s267, 32
        %s269 = scalar_lea.vmem [#allocation12], %s268
        %p272 = scmp.eq.s32.totalorder %s28, 0
        // Predicated region
        $region53: #{tpu_custom_call.1} parent=35 // pred_check
          %p273 = pneg %p272
        $region54: #{tpu_custom_call.1} parent=35 // pred_check_branch
          %275 = sbr.rel (%p273) target = $region56
        $region55: #{tpu_custom_call.1} parent=35 // pred_region
          %v276 = vld [vmem:[#allocation7] sm:$0xf]
          %v277 = vld [vmem:[#allocation7 + $0x4] sm:$0xf]
          %v278 = vld [vmem:[#allocation7 + $0x8] sm:$0xf]
          %v279 = vld [vmem:[#allocation7 + $0xc] sm:$0xf]
          %v280 = vld [vmem:[#allocation7 + $0x10] sm:$0xf]
          %v281 = vld [vmem:[#allocation7 + $0x14] sm:$0xf]
          %v282 = vld [vmem:[#allocation7 + $0x18] sm:$0xf]
          %v283 = vld [vmem:[#allocation7 + $0x1c] sm:$0xf]
          %v284 = vld [vmem:[#allocation7 + $0x20] sm:$0xf]
          %v285 = vld [vmem:[#allocation7 + $0x24] sm:$0xf]
          %v286 = vld [vmem:[#allocation7 + $0x28] sm:$0xf]
          %v287 = vld [vmem:[#allocation7 + $0x2c] sm:$0xf]
          %v288 = vld [vmem:[#allocation7 + $0x30] sm:$0xf]
          %v289 = vld [vmem:[#allocation7 + $0x34] sm:$0xf]
          %v290 = vld [vmem:[#allocation7 + $0x38] sm:$0xf]
          %v291 = vld [vmem:[#allocation7 + $0x3c] sm:$0xf]
          %v292 = vld [vmem:[#allocation7 + $0x40] sm:$0xf]
          %v293 = vld [vmem:[#allocation7 + $0x44] sm:$0xf]
          %v294 = vld [vmem:[#allocation7 + $0x48] sm:$0xf]
          %v295 = vld [vmem:[#allocation7 + $0x4c] sm:$0xf]
          %v296 = vld [vmem:[#allocation7 + $0x50] sm:$0xf]
          %v297 = vld [vmem:[#allocation7 + $0x54] sm:$0xf]
          %v298 = vld [vmem:[#allocation7 + $0x58] sm:$0xf]
          %v299 = vld [vmem:[#allocation7 + $0x5c] sm:$0xf]
          %v300 = vld [vmem:[%s233] sm:$0xf]
          %v301 = vld [vmem:[%s233 + $0x4] sm:$0xf]
          %v302 = vld [vmem:[%s233 + $0x8] sm:$0xf]
          %v303 = vld [vmem:[%s233 + $0xc] sm:$0xf]
          %v304 = vld [vmem:[%s233 + $0x10] sm:$0xf]
          %v305 = vld [vmem:[%s233 + $0x14] sm:$0xf]
          %v306 = vld [vmem:[%s233 + $0x18] sm:$0xf]
          %v307 = vld [vmem:[%s233 + $0x1c] sm:$0xf]
          %v332 = vunpack.c.l.b16 %v276
          %v333 = vunpack.c.l.b16 %v277
          %v334 = vunpack.c.l.b16 %v278
          %v335 = vunpack.c.l.b16 %v279
          %v336 = vunpack.c.l.b16 %v280
          %v337 = vunpack.c.l.b16 %v281
          %v338 = vunpack.c.l.b16 %v282
          %v339 = vunpack.c.l.b16 %v283
          %v340 = vunpack.c.l.b16 %v284
          %v341 = vunpack.c.l.b16 %v285
          %v342 = vunpack.c.l.b16 %v286
          %v343 = vunpack.c.l.b16 %v287
          %v344 = vunpack.c.l.b16 %v288
          %v345 = vunpack.c.l.b16 %v289
          %v346 = vunpack.c.l.b16 %v290
          %v347 = vunpack.c.l.b16 %v291
          %v348 = vunpack.c.l.b16 %v292
          %v349 = vunpack.c.l.b16 %v293
          %v350 = vunpack.c.l.b16 %v294
          %v351 = vunpack.c.l.b16 %v295
          %v352 = vunpack.c.l.b16 %v296
          %v353 = vunpack.c.l.b16 %v297
          %v354 = vunpack.c.l.b16 %v298
          %v355 = vunpack.c.l.b16 %v299
          %v356 = vpack.c.b16 %v333, %v332
          %v357 = vpack.c.b16 %v335, %v334
          %v358 = vpack.c.b16 %v337, %v336
          %v359 = vpack.c.b16 %v339, %v338
          %v360 = vpack.c.b16 %v341, %v340
          %v361 = vpack.c.b16 %v343, %v342
          %v362 = vpack.c.b16 %v345, %v344
          %v363 = vpack.c.b16 %v347, %v346
          %v364 = vpack.c.b16 %v349, %v348
          %v365 = vpack.c.b16 %v351, %v350
          %v366 = vpack.c.b16 %v353, %v352
          %v367 = vpack.c.b16 %v355, %v354
          %v376 = vunpack.c.l.b16 %v300
          %v377 = vunpack.c.l.b16 %v301
          %v378 = vunpack.c.l.b16 %v302
          %v379 = vunpack.c.l.b16 %v303
          %v380 = vunpack.c.l.b16 %v304
          %v381 = vunpack.c.l.b16 %v305
          %v382 = vunpack.c.l.b16 %v306
          %v383 = vunpack.c.l.b16 %v307
          %v384 = vpack.c.b16 %v377, %v376
          %v385 = vpack.c.b16 %v379, %v378
          %v386 = vpack.c.b16 %v381, %v380
          %v387 = vpack.c.b16 %v383, %v382
          %vm392 = vcmask 523264
          %v394 = vsel %vm392, %v356, 0
          %v397 = vsel %vm392, %v357, 0
          %v400 = vsel %vm392, %v358, 0
          %v403 = vsel %vm392, %v359, 0
          %v406 = vsel %vm392, %v360, 0
          %v409 = vsel %vm392, %v361, 0
          %v412 = vsel %vm392, %v362, 0
          %v415 = vsel %vm392, %v363, 0
          %v418 = vsel %vm392, %v364, 0
          %v421 = vsel %vm392, %v365, 0
          %v424 = vsel %vm392, %v366, 0
          %v427 = vsel %vm392, %v367, 0
          %429 = vmatprep.subr.bf16.mxu0 0
          %430 = vmatpush1.bf16.msra.mxu0 %v384
          %431 = vmatprep.subr.bf16.mxu0 0
          %432 = vmatpush1.bf16.msra.mxu0 %v385
          %433 = vmatprep.subr.bf16.mxu0 0
          %434 = vmatpush1.bf16.msra.mxu0 %v386
          %435 = vmatprep.subr.bf16.mxu0 0
          %436 = vmatpush1.bf16.msra.mxu0 %v387
          %437 = vmatprep.subr.bf16.mxu0 0
          %438 = vmatpush1.bf16.msra.mxu0 0
          %439 = vmatprep.subr.bf16.mxu0 0
          %440 = vmatpush1.bf16.msra.mxu0 0
          %441 = vmatprep.subr.bf16.mxu0 0
          %442 = vmatpush1.bf16.msra.mxu0 0
          %443 = vmatprep.subr.bf16.mxu0 0
          %444 = vmatpush1.bf16.msra.mxu0 0
          %445 = vmatprep.subr.bf16.mxu0 0
          %446 = vmatpush1.bf16.msra.mxu0 0
          %447 = vmatprep.subr.bf16.mxu0 0
          %448 = vmatpush1.bf16.msra.mxu0 0
          %449 = vmatprep.subr.bf16.mxu0 0
          %450 = vmatpush1.bf16.msra.mxu0 0
          %451 = vmatprep.subr.bf16.mxu0 0
          %452 = vmatpush1.bf16.msra.mxu0 0
          %453 = vmatprep.subr.bf16.mxu0 0
          %454 = vmatpush1.bf16.msra.mxu0 0
          %455 = vmatprep.subr.bf16.mxu0 0
          %456 = vmatpush1.bf16.msra.mxu0 0
          %457 = vmatprep.subr.bf16.mxu0 0
          %458 = vmatpush1.bf16.msra.mxu0 0
          %459 = vmatprep.subr.bf16.mxu0 0
          %460 = vmatpush1.bf16.msra.mxu0 0
          %461 = vmatprep.mubr.bf16.mxu0 0
          %462 = vmatmul.mubr.bf16.gmra.mrb[0].mxu0 %v394
          %v463 = vpop.f32.mrb[0].mxu0
          %v464 = vadd.f32 0.0, %v463
          %v465 = vpop.f32.mrb[0].mxu0
          %v466 = vpop.f32.mrb[0].mxu0
          %v467 = vadd.f32 0.0, %v466
          %v468 = vpop.f32.mrb[0].mxu0
          %469 = vmatprep.mubr.bf16.mxu0 0
          %470 = vmatmul.mubr.bf16.gmra.mrb[0].mxu0 %v397
          %v471 = vpop.f32.mrb[0].mxu0
          %v472 = vadd.f32 0.0, %v471
          %v473 = vpop.f32.mrb[0].mxu0
          %v474 = vpop.f32.mrb[0].mxu0
          %v475 = vadd.f32 0.0, %v474
          %v476 = vpop.f32.mrb[0].mxu0
          %477 = vmatprep.mubr.bf16.mxu0 0
          %478 = vmatmul.mubr.bf16.gmra.mrb[0].mxu0 %v400
          %v479 = vpop.f32.mrb[0].mxu0
          %v480 = vadd.f32 0.0, %v479
          %v481 = vpop.f32.mrb[0].mxu0
          %v482 = vpop.f32.mrb[0].mxu0
          %v483 = vadd.f32 0.0, %v482
          %v484 = vpop.f32.mrb[0].mxu0
          %485 = vmatprep.mubr.bf16.mxu0 0
          %486 = vmatmul.mubr.bf16.gmra.mrb[0].mxu0 %v403
          %v487 = vpop.f32.mrb[0].mxu0
          %v488 = vadd.f32 0.0, %v487
          %v489 = vpop.f32.mrb[0].mxu0
          %v490 = vpop.f32.mrb[0].mxu0
          %v491 = vadd.f32 0.0, %v490
          %v492 = vpop.f32.mrb[0].mxu0
          %493 = vmatprep.mubr.bf16.mxu0 0
          %494 = vmatmul.mubr.bf16.gmra.mrb[0].mxu0 %v406
          %v495 = vpop.f32.mrb[0].mxu0
          %v496 = vadd.f32 0.0, %v495
          %v497 = vpop.f32.mrb[0].mxu0
          %v498 = vpop.f32.mrb[0].mxu0
          %v499 = vadd.f32 0.0, %v498
          %v500 = vpop.f32.mrb[0].mxu0
          %501 = vmatprep.mubr.bf16.mxu0 0
          %502 = vmatmul.mubr.bf16.gmra.mrb[0].mxu0 %v409
          %v503 = vpop.f32.mrb[0].mxu0
          %v504 = vadd.f32 0.0, %v503
          %v505 = vpop.f32.mrb[0].mxu0
          %v506 = vpop.f32.mrb[0].mxu0
          %v507 = vadd.f32 0.0, %v506
          %v508 = vpop.f32.mrb[0].mxu0
          %509 = vmatprep.mubr.bf16.mxu0 0
          %510 = vmatmul.mubr.bf16.gmra.mrb[0].mxu0 %v412
          %v511 = vpop.f32.mrb[0].mxu0
          %v512 = vadd.f32 0.0, %v511
          %v513 = vpop.f32.mrb[0].mxu0
          %v514 = vpop.f32.mrb[0].mxu0
          %v515 = vadd.f32 0.0, %v514
          %v516 = vpop.f32.mrb[0].mxu0
          %517 = vmatprep.mubr.bf16.mxu0 0
          %518 = vmatmul.mubr.bf16.gmra.mrb[0].mxu0 %v415
          %v519 = vpop.f32.mrb[0].mxu0
          %v520 = vadd.f32 0.0, %v519
          %v521 = vpop.f32.mrb[0].mxu0
          %v522 = vpop.f32.mrb[0].mxu0
          %v523 = vadd.f32 0.0, %v522
          %v524 = vpop.f32.mrb[0].mxu0
          %525 = vmatprep.mubr.bf16.mxu0 0
          %526 = vmatmul.mubr.bf16.gmra.mrb[0].mxu0 %v418
          %v527 = vpop.f32.mrb[0].mxu0
          %v528 = vadd.f32 0.0, %v527
          %v529 = vpop.f32.mrb[0].mxu0
          %v530 = vpop.f32.mrb[0].mxu0
          %v531 = vadd.f32 0.0, %v530
          %v532 = vpop.f32.mrb[0].mxu0
          %533 = vmatprep.mubr.bf16.mxu0 0
          %534 = vmatmul.mubr.bf16.gmra.mrb[0].mxu0 %v421
          %v535 = vpop.f32.mrb[0].mxu0
          %v536 = vadd.f32 0.0, %v535
          %v537 = vpop.f32.mrb[0].mxu0
          %v538 = vpop.f32.mrb[0].mxu0
          %v539 = vadd.f32 0.0, %v538
          %v540 = vpop.f32.mrb[0].mxu0
          %541 = vmatprep.mubr.bf16.mxu0 0
          %542 = vmatmul.mubr.bf16.gmra.mrb[0].mxu0 %v424
          %v543 = vpop.f32.mrb[0].mxu0
          %v544 = vadd.f32 0.0, %v543
          %v545 = vpop.f32.mrb[0].mxu0
          %v546 = vpop.f32.mrb[0].mxu0
          %v547 = vadd.f32 0.0, %v546
          %v548 = vpop.f32.mrb[0].mxu0
          %549 = vmatprep.mubr.bf16.mxu0 0
          %550 = vmatmul.mubr.bf16.gmra.mrb[0].mxu0 %v427
          %v551 = vpop.f32.mrb[0].mxu0
          %v552 = vadd.f32 0.0, %v551
          %v553 = vpop.f32.mrb[0].mxu0
          %v554 = vpop.f32.mrb[0].mxu0
          %v555 = vadd.f32 0.0, %v554
          %v556 = vpop.f32.mrb[0].mxu0
          %557 = vdwg.mxu0
          %v558 = vpack.c.bf16 %v467, %v464
          %v559 = vpack.c.bf16 %v475, %v472
          %v560 = vpack.c.bf16 %v483, %v480
          %v561 = vpack.c.bf16 %v491, %v488
          %v562 = vpack.c.bf16 %v499, %v496
          %v563 = vpack.c.bf16 %v507, %v504
          %v564 = vpack.c.bf16 %v515, %v512
          %v565 = vpack.c.bf16 %v523, %v520
          %v566 = vpack.c.bf16 %v531, %v528
          %v567 = vpack.c.bf16 %v539, %v536
          %v568 = vpack.c.bf16 %v547, %v544
          %v569 = vpack.c.bf16 %v555, %v552
          %vm570 = vcmask 261120
          %571 = vst.msk [vmem:[#allocation2] sm:$0xff] %vm570, %v558
          %572 = vst.msk [vmem:[#allocation2 + $0x8] sm:$0xff] %vm570, %v559
          %573 = vst.msk [vmem:[#allocation2 + $0x10] sm:$0xff] %vm570, %v560
          %574 = vst.msk [vmem:[#allocation2 + $0x18] sm:$0xff] %vm570, %v561
          %575 = vst.msk [vmem:[#allocation2 + $0x20] sm:$0xff] %vm570, %v562
          %576 = vst.msk [vmem:[#allocation2 + $0x28] sm:$0xff] %vm570, %v563
          %577 = vst.msk [vmem:[#allocation2 + $0x30] sm:$0xff] %vm570, %v564
          %578 = vst.msk [vmem:[#allocation2 + $0x38] sm:$0xff] %vm570, %v565
          %579 = vst.msk [vmem:[#allocation2 + $0x40] sm:$0xff] %vm570, %v566
          %580 = vst.msk [vmem:[#allocation2 + $0x48] sm:$0xff] %vm570, %v567
          %581 = vst.msk [vmem:[#allocation2 + $0x50] sm:$0xff] %vm570, %v568
          %582 = vst.msk [vmem:[#allocation2 + $0x58] sm:$0xff] %vm570, %v569
        $region56: #{tpu_custom_call.1} parent=35 // pred_fallthru
          _
        %s583 = smul.u32 %s28, 64
        %s584 = sadd.s32 %s583, 64
        %s585 = sadd.s32 %s583, 128
        %s586 = sshra.s32 %s583, 4
        %s587 = sand.u32 %s583, 15
        %s588 = smul.addr %s586, 8
        %s589 = scalar_lea.vmem [#allocation2], %s588
        %v590 = vld [vmem:[%s589] sm:$0xff]
        %s591 = sshra.s32 %s584, 4
        %s592 = sand.u32 %s584, 15
        %s593 = smul.addr %s591, 8
        %s594 = scalar_lea.vmem [#allocation2], %s593
        %v595 = vld [vmem:[%s594] sm:$0xff]
        %s596 = sshra.s32 %s585, 4
        %s597 = sand.u32 %s585, 15
        %s598 = smul.addr %s596, 8
        %s599 = scalar_lea.vmem [#allocation2], %s598
        %v600 = vld [vmem:[%s599] sm:$0xff]
        %601 = vxpose.xlu0.c.b16.start [1/8] %v590, 128
        %602 = vxpose.xlu0.c.b16.cont [2/8] 0, 128
        %603 = vxpose.xlu0.c.b16.cont [3/8] 0, 128
        %604 = vxpose.xlu0.c.b16.cont [4/8] 0, 128
        %605 = vxpose.xlu0.c.b16.cont [5/8] 0, 128
        %606 = vxpose.xlu0.c.b16.cont [6/8] 0, 128
        %607 = vxpose.xlu0.c.b16.cont [7/8] 0, 128
        %608 = vxpose.xlu0.c.b16.end [8/8] 0, 128
        %v609 = vpop.trf.xlu0
        %v610 = vpop.trf.xlu0
        %v611 = vpop.trf.xlu0
        %v612 = vpop.trf.xlu0
        %v613 = vpop.trf.xlu0
        %v614 = vpop.trf.xlu0
        %v615 = vpop.trf.xlu0
        %v616 = vpop.trf.xlu0
        %vm617 = vcmask 130048
        %v619 = vsel %vm617, %v609, 0
        %v622 = vsel %vm617, %v610, 0
        %624 = vmatprep.subr.bf16.mxu0 0
        %625 = vmatpush1.bf16.msra.mxu0 %v595
        %626 = vmatprep.subr.bf16.mxu0 0
        %627 = vmatpush1.bf16.msra.mxu0 0
        %628 = vmatprep.subr.bf16.mxu0 0
        %629 = vmatpush1.bf16.msra.mxu0 0
        %630 = vmatprep.subr.bf16.mxu0 0
        %631 = vmatpush1.bf16.msra.mxu0 0
        %632 = vmatprep.subr.bf16.mxu0 0
        %633 = vmatpush1.bf16.msra.mxu0 0
        %634 = vmatprep.subr.bf16.mxu0 0
        %635 = vmatpush1.bf16.msra.mxu0 0
        %636 = vmatprep.subr.bf16.mxu0 0
        %637 = vmatpush1.bf16.msra.mxu0 0
        %638 = vmatprep.subr.bf16.mxu0 0
        %639 = vmatpush1.bf16.msra.mxu0 0
        %640 = vmatprep.subr.bf16.mxu0 0
        %641 = vmatpush1.bf16.msra.mxu0 0
        %642 = vmatprep.subr.bf16.mxu0 0
        %643 = vmatpush1.bf16.msra.mxu0 0
        %644 = vmatprep.subr.bf16.mxu0 0
        %645 = vmatpush1.bf16.msra.mxu0 0
        %646 = vmatprep.subr.bf16.mxu0 0
        %647 = vmatpush1.bf16.msra.mxu0 0
        %648 = vmatprep.subr.bf16.mxu0 0
        %649 = vmatpush1.bf16.msra.mxu0 0
        %650 = vmatprep.subr.bf16.mxu0 0
        %651 = vmatpush1.bf16.msra.mxu0 0
        %652 = vmatprep.subr.bf16.mxu0 0
        %653 = vmatpush1.bf16.msra.mxu0 0
        %654 = vmatprep.subr.bf16.mxu0 0
        %655 = vmatpush1.bf16.msra.mxu0 0
        %656 = vmatprep.mubr.bf16.mxu0 0
        %657 = vmatmul.mubr.bf16.gmra.mrb[0].mxu0 %v619
        %v658 = vpop.f32.mrb[0].mxu0
        %v659 = vadd.f32 0.0, %v658
        %v660 = vpop.f32.mrb[0].mxu0
        %v661 = vpop.f32.mrb[0].mxu0
        %v662 = vadd.f32 0.0, %v661
        %v663 = vpop.f32.mrb[0].mxu0
        %664 = vmatprep.mubr.bf16.mxu0 0
        %665 = vmatmul.mubr.bf16.gmra.mrb[0].mxu0 %v622
        %v666 = vpop.f32.mrb[0].mxu0
        %v667 = vadd.f32 0.0, %v666
        %v668 = vpop.f32.mrb[0].mxu0
        %v669 = vpop.f32.mrb[0].mxu0
        %v670 = vadd.f32 0.0, %v669
        %v671 = vpop.f32.mrb[0].mxu0
        %672 = vdwg.mxu0
        %vm673 = vcmask 261120
        %v674 = vsel %vm673, %v659, -inf
        %675 = vmax.xlane.f32.xlu0 %v674
        %v676 = vpop.xlane.xlu0 %675
        %v677 = vsel %vm673, %v662, -inf
        %678 = vmax.xlane.f32.xlu0 %v677
        %v679 = vpop.xlane.xlu0 %678
        %v680 = vsel %vm673, %v667, -inf
        %681 = vmax.xlane.f32.xlu0 %v680
        %v682 = vpop.xlane.xlu0 %681
        %v683 = vsel %vm673, %v670, -inf
        %684 = vmax.xlane.f32.xlu0 %v683
        %v685 = vpop.xlane.xlu0 %684
        %v686 = vsub.f32 %v659, %v676
        %v687 = vsub.f32 %v662, %v679
        %v688 = vsub.f32 %v667, %v682
        %v689 = vsub.f32 %v670, %v685
        %v690 = vpack.c.bf16 %v687, %v686
        %v691 = vpack.c.bf16 %v689, %v688
        %v693 = vmul.bf16 %v690, 1069105081
        %v694 = vpow.bf16.pop %v693
        %v696 = vmul.bf16 %v691, 1069105081
        %v697 = vpow.bf16.pop %v696
        %v699 = vsel %vm673, 1065369472, 0
        %v702 = vsel %vm673, %v694, 0
        %v705 = vsel %vm673, %v697, 0
        %707 = vmatprep.subr.bf16.mxu0 0
        %708 = vmatpush1.bf16.xpose.msra.mxu0 %v702
        %709 = vmatprep.subr.bf16.mxu0 0
        %710 = vmatpush1.bf16.xpose.msra.mxu0 %v705
        %711 = vmatprep.subr.bf16.mxu0 0
        %712 = vmatpush1.bf16.xpose.msra.mxu0 0
        %713 = vmatprep.subr.bf16.mxu0 0
        %714 = vmatpush1.bf16.xpose.msra.mxu0 0
        %715 = vmatprep.subr.bf16.mxu0 0
        %716 = vmatpush1.bf16.xpose.msra.mxu0 0
        %717 = vmatprep.subr.bf16.mxu0 0
        %718 = vmatpush1.bf16.xpose.msra.mxu0 0
        %719 = vmatprep.subr.bf16.mxu0 0
        %720 = vmatpush1.bf16.xpose.msra.mxu0 0
        %721 = vmatprep.subr.bf16.mxu0 0
        %722 = vmatpush1.bf16.xpose.msra.mxu0 0
        %723 = vmatprep.subr.bf16.mxu0 0
        %724 = vmatpush1.bf16.xpose.msra.mxu0 0
        %725 = vmatprep.subr.bf16.mxu0 0
        %726 = vmatpush1.bf16.xpose.msra.mxu0 0
        %727 = vmatprep.subr.bf16.mxu0 0
        %728 = vmatpush1.bf16.xpose.msra.mxu0 0
        %729 = vmatprep.subr.bf16.mxu0 0
        %730 = vmatpush1.bf16.xpose.msra.mxu0 0
        %731 = vmatprep.subr.bf16.mxu0 0
        %732 = vmatpush1.bf16.xpose.msra.mxu0 0
        %733 = vmatprep.subr.bf16.mxu0 0
        %734 = vmatpush1.bf16.xpose.msra.mxu0 0
        %735 = vmatprep.subr.bf16.mxu0 0
        %736 = vmatpush1.bf16.xpose.msra.mxu0 0
        %737 = vmatprep.subr.bf16.mxu0 0
        %738 = vmatpush1.bf16.xpose.msra.mxu0 0
        %739 = vmatprep.mubr.bf16.mxu0 0
        %740 = vmatmul.mubr.bf16.gmra.mrb[0].mxu0 %v699
        %v741 = vpop.f32.mrb[0].mxu0
        %v742 = vadd.f32 0.0, %v741
        %v743 = vpop.f32.mrb[0].mxu0
        %v744 = vpop.f32.mrb[0].mxu0
        %v745 = vpop.f32.mrb[0].mxu0
        %746 = vdwg.mxu0
        %v748 = vsel %vm673, %v600, 0
        %750 = vmatprep.subr.bf16.mxu0 0
        %751 = vmatpush1.bf16.xpose.msra.mxu0 %v702
        %752 = vmatprep.subr.bf16.mxu0 0
        %753 = vmatpush1.bf16.xpose.msra.mxu0 %v705
        %754 = vmatprep.subr.bf16.mxu0 0
        %755 = vmatpush1.bf16.xpose.msra.mxu0 0
        %756 = vmatprep.subr.bf16.mxu0 0
        %757 = vmatpush1.bf16.xpose.msra.mxu0 0
        %758 = vmatprep.subr.bf16.mxu0 0
        %759 = vmatpush1.bf16.xpose.msra.mxu0 0
        %760 = vmatprep.subr.bf16.mxu0 0
        %761 = vmatpush1.bf16.xpose.msra.mxu0 0
        %762 = vmatprep.subr.bf16.mxu0 0
        %763 = vmatpush1.bf16.xpose.msra.mxu0 0
        %764 = vmatprep.subr.bf16.mxu0 0
        %765 = vmatpush1.bf16.xpose.msra.mxu0 0
        %766 = vmatprep.subr.bf16.mxu0 0
        %767 = vmatpush1.bf16.xpose.msra.mxu0 0
        %768 = vmatprep.subr.bf16.mxu0 0
        %769 = vmatpush1.bf16.xpose.msra.mxu0 0
        %770 = vmatprep.subr.bf16.mxu0 0
        %771 = vmatpush1.bf16.xpose.msra.mxu0 0
        %772 = vmatprep.subr.bf16.mxu0 0
        %773 = vmatpush1.bf16.xpose.msra.mxu0 0
        %774 = vmatprep.subr.bf16.mxu0 0
        %775 = vmatpush1.bf16.xpose.msra.mxu0 0
        %776 = vmatprep.subr.bf16.mxu0 0
        %777 = vmatpush1.bf16.xpose.msra.mxu0 0
        %778 = vmatprep.subr.bf16.mxu0 0
        %779 = vmatpush1.bf16.xpose.msra.mxu0 0
        %780 = vmatprep.subr.bf16.mxu0 0
        %781 = vmatpush1.bf16.xpose.msra.mxu0 0
        %782 = vmatprep.mubr.bf16.mxu0 0
        %783 = vmatmul.mubr.bf16.gmra.mrb[0].mxu0 %v748
        %v784 = vpop.f32.mrb[0].mxu0
        %v785 = vadd.f32 0.0, %v784
        %v786 = vpop.f32.mrb[0].mxu0
        %v787 = vpop.f32.mrb[0].mxu0
        %v788 = vadd.f32 0.0, %v787
        %v789 = vpop.f32.mrb[0].mxu0
        %790 = vdwg.mxu0
        %v791 = vrcp.pop %v742
        %v792 = vlaneseq
        %v793 = vshrl.u32 %v792, 7
        %v794 = vsub.s32 0, %v793
        %v795 = vrot.slane %v791, %v794
        %v796 = vmul.f32 %v785, %v795
        %v797 = vmul.f32 %v788, %v795
        %v798 = vpack.c.bf16 %v797, %v796
        %s799 = smul.addr %s586, 8
        %s800 = scalar_lea.vmem [#allocation3], %s799
        %801 = vst.msk [vmem:[%s800] sm:$0xff] %vm673, %v798
        %s802 = sadd.s32 %s583, 16
        %s803 = sadd.s32 %s583, 80
        %s804 = sadd.s32 %s583, 144
        %s805 = sshra.s32 %s802, 4
        %s806 = sand.u32 %s802, 15
        %s807 = smul.addr %s805, 8
        %s808 = scalar_lea.vmem [#allocation2], %s807
        %v809 = vld [vmem:[%s808] sm:$0xff]
        %s810 = sshra.s32 %s803, 4
        %s811 = sand.u32 %s803, 15
        %s812 = smul.addr %s810, 8
        %s813 = scalar_lea.vmem [#allocation2], %s812
        %v814 = vld [vmem:[%s813] sm:$0xff]
        %s815 = sshra.s32 %s804, 4
        %s816 = sand.u32 %s804, 15
        %s817 = smul.addr %s815, 8
        %s818 = scalar_lea.vmem [#allocation2], %s817
        %v819 = vld [vmem:[%s818] sm:$0xff]
        %820 = vxpose.xlu0.c.b16.start [1/8] %v809, 128
        %821 = vxpose.xlu0.c.b16.cont [2/8] 0, 128
        %822 = vxpose.xlu0.c.b16.cont [3/8] 0, 128
        %823 = vxpose.xlu0.c.b16.cont [4/8] 0, 128
        %824 = vxpose.xlu0.c.b16.cont [5/8] 0, 128
        %825 = vxpose.xlu0.c.b16.cont [6/8] 0, 128
        %826 = vxpose.xlu0.c.b16.cont [7/8] 0, 128
        %827 = vxpose.xlu0.c.b16.end [8/8] 0, 128
        %v828 = vpop.trf.xlu0
        %v829 = vpop.trf.xlu0
        %v830 = vpop.trf.xlu0
        %v831 = vpop.trf.xlu0
        %v832 = vpop.trf.xlu0
        %v833 = vpop.trf.xlu0
        %v834 = vpop.trf.xlu0
        %v835 = vpop.trf.xlu0
        %v837 = vsel %vm617, %v828, 0
        %v840 = vsel %vm617, %v829, 0
        %842 = vmatprep.subr.bf16.mxu0 0
        %843 = vmatpush1.bf16.msra.mxu0 %v814
        %844 = vmatprep.subr.bf16.mxu0 0
        %845 = vmatpush1.bf16.msra.mxu0 0
        %846 = vmatprep.subr.bf16.mxu0 0
        %847 = vmatpush1.bf16.msra.mxu0 0
        %848 = vmatprep.subr.bf16.mxu0 0
        %849 = vmatpush1.bf16.msra.mxu0 0
        %850 = vmatprep.subr.bf16.mxu0 0
        %851 = vmatpush1.bf16.msra.mxu0 0
        %852 = vmatprep.subr.bf16.mxu0 0
        %853 = vmatpush1.bf16.msra.mxu0 0
        %854 = vmatprep.subr.bf16.mxu0 0
        %855 = vmatpush1.bf16.msra.mxu0 0
        %856 = vmatprep.subr.bf16.mxu0 0
        %857 = vmatpush1.bf16.msra.mxu0 0
        %858 = vmatprep.subr.bf16.mxu0 0
        %859 = vmatpush1.bf16.msra.mxu0 0
        %860 = vmatprep.subr.bf16.mxu0 0
        %861 = vmatpush1.bf16.msra.mxu0 0
        %862 = vmatprep.subr.bf16.mxu0 0
        %863 = vmatpush1.bf16.msra.mxu0 0
        %864 = vmatprep.subr.bf16.mxu0 0
        %865 = vmatpush1.bf16.msra.mxu0 0
        %866 = vmatprep.subr.bf16.mxu0 0
        %867 = vmatpush1.bf16.msra.mxu0 0
        %868 = vmatprep.subr.bf16.mxu0 0
        %869 = vmatpush1.bf16.msra.mxu0 0
        %870 = vmatprep.subr.bf16.mxu0 0
        %871 = vmatpush1.bf16.msra.mxu0 0
        %872 = vmatprep.subr.bf16.mxu0 0
        %873 = vmatpush1.bf16.msra.mxu0 0
        %874 = vmatprep.mubr.bf16.mxu0 0
        %875 = vmatmul.mubr.bf16.gmra.mrb[0].mxu0 %v837
        %v876 = vpop.f32.mrb[0].mxu0
        %v877 = vadd.f32 0.0, %v876
        %v878 = vpop.f32.mrb[0].mxu0
        %v879 = vpop.f32.mrb[0].mxu0
        %v880 = vadd.f32 0.0, %v879
        %v881 = vpop.f32.mrb[0].mxu0
        %882 = vmatprep.mubr.bf16.mxu0 0
        %883 = vmatmul.mubr.bf16.gmra.mrb[0].mxu0 %v840
        %v884 = vpop.f32.mrb[0].mxu0
        %v885 = vadd.f32 0.0, %v884
        %v886 = vpop.f32.mrb[0].mxu0
        %v887 = vpop.f32.mrb[0].mxu0
        %v888 = vadd.f32 0.0, %v887
        %v889 = vpop.f32.mrb[0].mxu0
        %890 = vdwg.mxu0
        %v891 = vsel %vm673, %v877, -inf
        %892 = vmax.xlane.f32.xlu0 %v891
        %v893 = vpop.xlane.xlu0 %892
        %v894 = vsel %vm673, %v880, -inf
        %895 = vmax.xlane.f32.xlu0 %v894
        %v896 = vpop.xlane.xlu0 %895
        %v897 = vsel %vm673, %v885, -inf
        %898 = vmax.xlane.f32.xlu0 %v897
        %v899 = vpop.xlane.xlu0 %898
        %v900 = vsel %vm673, %v888, -inf
        %901 = vmax.xlane.f32.xlu0 %v900
        %v902 = vpop.xlane.xlu0 %901
        %v903 = vsub.f32 %v877, %v893
        %v904 = vsub.f32 %v880, %v896
        %v905 = vsub.f32 %v885, %v899
        %v906 = vsub.f32 %v888, %v902
        %v907 = vpack.c.bf16 %v904, %v903
        %v908 = vpack.c.bf16 %v906, %v905
        %v910 = vmul.bf16 %v907, 1069105081
        %v911 = vpow.bf16.pop %v910
        %v913 = vmul.bf16 %v908, 1069105081
        %v914 = vpow.bf16.pop %v913
        %v916 = vsel %vm673, %v911, 0
        %v919 = vsel %vm673, %v914, 0
        %921 = vmatprep.subr.bf16.mxu0 0
        %922 = vmatpush1.bf16.xpose.msra.mxu0 %v916
        %923 = vmatprep.subr.bf16.mxu0 0
        %924 = vmatpush1.bf16.xpose.msra.mxu0 %v919
        %925 = vmatprep.subr.bf16.mxu0 0
        %926 = vmatpush1.bf16.xpose.msra.mxu0 0
        %927 = vmatprep.subr.bf16.mxu0 0
        %928 = vmatpush1.bf16.xpose.msra.mxu0 0
        %929 = vmatprep.subr.bf16.mxu0 0
        %930 = vmatpush1.bf16.xpose.msra.mxu0 0
        %931 = vmatprep.subr.bf16.mxu0 0
        %932 = vmatpush1.bf16.xpose.msra.mxu0 0
        %933 = vmatprep.subr.bf16.mxu0 0
        %934 = vmatpush1.bf16.xpose.msra.mxu0 0
        %935 = vmatprep.subr.bf16.mxu0 0
        %936 = vmatpush1.bf16.xpose.msra.mxu0 0
        %937 = vmatprep.subr.bf16.mxu0 0
        %938 = vmatpush1.bf16.xpose.msra.mxu0 0
        %939 = vmatprep.subr.bf16.mxu0 0
        %940 = vmatpush1.bf16.xpose.msra.mxu0 0
        %941 = vmatprep.subr.bf16.mxu0 0
        %942 = vmatpush1.bf16.xpose.msra.mxu0 0
        %943 = vmatprep.subr.bf16.mxu0 0
        %944 = vmatpush1.bf16.xpose.msra.mxu0 0
        %945 = vmatprep.subr.bf16.mxu0 0
        %946 = vmatpush1.bf16.xpose.msra.mxu0 0
        %947 = vmatprep.subr.bf16.mxu0 0
        %948 = vmatpush1.bf16.xpose.msra.mxu0 0
        %949 = vmatprep.subr.bf16.mxu0 0
        %950 = vmatpush1.bf16.xpose.msra.mxu0 0
        %951 = vmatprep.subr.bf16.mxu0 0
        %952 = vmatpush1.bf16.xpose.msra.mxu0 0
        %953 = vmatprep.mubr.bf16.mxu0 0
        %954 = vmatmul.mubr.bf16.gmra.mrb[0].mxu0 %v699
        %v955 = vpop.f32.mrb[0].mxu0
        %v956 = vadd.f32 0.0, %v955
        %v957 = vpop.f32.mrb[0].mxu0
        %v958 = vpop.f32.mrb[0].mxu0
        %v959 = vpop.f32.mrb[0].mxu0
        %960 = vdwg.mxu0
        %v962 = vsel %vm673, %v819, 0
        %964 = vmatprep.subr.bf16.mxu0 0
        %965 = vmatpush1.bf16.xpose.msra.mxu0 %v916
        %966 = vmatprep.subr.bf16.mxu0 0
        %967 = vmatpush1.bf16.xpose.msra.mxu0 %v919
        %968 = vmatprep.subr.bf16.mxu0 0
        %969 = vmatpush1.bf16.xpose.msra.mxu0 0
        %970 = vmatprep.subr.bf16.mxu0 0
        %971 = vmatpush1.bf16.xpose.msra.mxu0 0
        %972 = vmatprep.subr.bf16.mxu0 0
        %973 = vmatpush1.bf16.xpose.msra.mxu0 0
        %974 = vmatprep.subr.bf16.mxu0 0
        %975 = vmatpush1.bf16.xpose.msra.mxu0 0
        %976 = vmatprep.subr.bf16.mxu0 0
        %977 = vmatpush1.bf16.xpose.msra.mxu0 0
        %978 = vmatprep.subr.bf16.mxu0 0
        %979 = vmatpush1.bf16.xpose.msra.mxu0 0
        %980 = vmatprep.subr.bf16.mxu0 0
        %981 = vmatpush1.bf16.xpose.msra.mxu0 0
        %982 = vmatprep.subr.bf16.mxu0 0
        %983 = vmatpush1.bf16.xpose.msra.mxu0 0
        %984 = vmatprep.subr.bf16.mxu0 0
        %985 = vmatpush1.bf16.xpose.msra.mxu0 0
        %986 = vmatprep.subr.bf16.mxu0 0
        %987 = vmatpush1.bf16.xpose.msra.mxu0 0
        %988 = vmatprep.subr.bf16.mxu0 0
        %989 = vmatpush1.bf16.xpose.msra.mxu0 0
        %990 = vmatprep.subr.bf16.mxu0 0
        %991 = vmatpush1.bf16.xpose.msra.mxu0 0
        %992 = vmatprep.subr.bf16.mxu0 0
        %993 = vmatpush1.bf16.xpose.msra.mxu0 0
        %994 = vmatprep.subr.bf16.mxu0 0
        %995 = vmatpush1.bf16.xpose.msra.mxu0 0
        %996 = vmatprep.mubr.bf16.mxu0 0
        %997 = vmatmul.mubr.bf16.gmra.mrb[0].mxu0 %v962
        %v998 = vpop.f32.mrb[0].mxu0
        %v999 = vadd.f32 0.0, %v998
        %v1000 = vpop.f32.mrb[0].mxu0
        %v1001 = vpop.f32.mrb[0].mxu0
        %v1002 = vadd.f32 0.0, %v1001
        %v1003 = vpop.f32.mrb[0].mxu0
        %1004 = vdwg.mxu0
        %v1005 = vrcp.pop %v956
        %v1006 = vlaneseq
        %v1007 = vshrl.u32 %v1006, 7
        %v1008 = vsub.s32 0, %v1007
        %v1009 = vrot.slane %v1005, %v1008
        %v1010 = vmul.f32 %v999, %v1009
        %v1011 = vmul.f32 %v1002, %v1009
        %v1012 = vpack.c.bf16 %v1011, %v1010
        %s1013 = smul.addr %s805, 8
        %s1014 = scalar_lea.vmem [#allocation3], %s1013
        %1015 = vst.msk [vmem:[%s1014] sm:$0xff] %vm673, %v1012
        %s1016 = sadd.s32 %s583, 32
        %s1017 = sadd.s32 %s583, 96
        %s1018 = sadd.s32 %s583, 160
        %s1019 = sshra.s32 %s1016, 4
        %s1020 = sand.u32 %s1016, 15
        %s1021 = smul.addr %s1019, 8
        %s1022 = scalar_lea.vmem [#allocation2], %s1021
        %v1023 = vld [vmem:[%s1022] sm:$0xff]
        %s1024 = sshra.s32 %s1017, 4
        %s1025 = sand.u32 %s1017, 15
        %s1026 = smul.addr %s1024, 8
        %s1027 = scalar_lea.vmem [#allocation2], %s1026
        %v1028 = vld [vmem:[%s1027] sm:$0xff]
        %s1029 = sshra.s32 %s1018, 4
        %s1030 = sand.u32 %s1018, 15
        %s1031 = smul.addr %s1029, 8
        %s1032 = scalar_lea.vmem [#allocation2], %s1031
        %v1033 = vld [vmem:[%s1032] sm:$0xff]
        %1034 = vxpose.xlu0.c.b16.start [1/8] %v1023, 128
        %1035 = vxpose.xlu0.c.b16.cont [2/8] 0, 128
        %1036 = vxpose.xlu0.c.b16.cont [3/8] 0, 128
        %1037 = vxpose.xlu0.c.b16.cont [4/8] 0, 128
        %1038 = vxpose.xlu0.c.b16.cont [5/8] 0, 128
        %1039 = vxpose.xlu0.c.b16.cont [6/8] 0, 128
        %1040 = vxpose.xlu0.c.b16.cont [7/8] 0, 128
        %1041 = vxpose.xlu0.c.b16.end [8/8] 0, 128
        %v1042 = vpop.trf.xlu0
        %v1043 = vpop.trf.xlu0
        %v1044 = vpop.trf.xlu0
        %v1045 = vpop.trf.xlu0
        %v1046 = vpop.trf.xlu0
        %v1047 = vpop.trf.xlu0
        %v1048 = vpop.trf.xlu0
        %v1049 = vpop.trf.xlu0
        %v1051 = vsel %vm617, %v1042, 0
        %v1054 = vsel %vm617, %v1043, 0
        %1056 = vmatprep.subr.bf16.mxu0 0
        %1057 = vmatpush1.bf16.msra.mxu0 %v1028
        %1058 = vmatprep.subr.bf16.mxu0 0
        %1059 = vmatpush1.bf16.msra.mxu0 0
        %1060 = vmatprep.subr.bf16.mxu0 0
        %1061 = vmatpush1.bf16.msra.mxu0 0
        %1062 = vmatprep.subr.bf16.mxu0 0
        %1063 = vmatpush1.bf16.msra.mxu0 0
        %1064 = vmatprep.subr.bf16.mxu0 0
        %1065 = vmatpush1.bf16.msra.mxu0 0
        %1066 = vmatprep.subr.bf16.mxu0 0
        %1067 = vmatpush1.bf16.msra.mxu0 0
        %1068 = vmatprep.subr.bf16.mxu0 0
        %1069 = vmatpush1.bf16.msra.mxu0 0
        %1070 = vmatprep.subr.bf16.mxu0 0
        %1071 = vmatpush1.bf16.msra.mxu0 0
        %1072 = vmatprep.subr.bf16.mxu0 0
        %1073 = vmatpush1.bf16.msra.mxu0 0
        %1074 = vmatprep.subr.bf16.mxu0 0
        %1075 = vmatpush1.bf16.msra.mxu0 0
        %1076 = vmatprep.subr.bf16.mxu0 0
        %1077 = vmatpush1.bf16.msra.mxu0 0
        %1078 = vmatprep.subr.bf16.mxu0 0
        %1079 = vmatpush1.bf16.msra.mxu0 0
        %1080 = vmatprep.subr.bf16.mxu0 0
        %1081 = vmatpush1.bf16.msra.mxu0 0
        %1082 = vmatprep.subr.bf16.mxu0 0
        %1083 = vmatpush1.bf16.msra.mxu0 0
        %1084 = vmatprep.subr.bf16.mxu0 0
        %1085 = vmatpush1.bf16.msra.mxu0 0
        %1086 = vmatprep.subr.bf16.mxu0 0
        %1087 = vmatpush1.bf16.msra.mxu0 0
        %1088 = vmatprep.mubr.bf16.mxu0 0
        %1089 = vmatmul.mubr.bf16.gmra.mrb[0].mxu0 %v1051
        %v1090 = vpop.f32.mrb[0].mxu0
        %v1091 = vadd.f32 0.0, %v1090
        %v1092 = vpop.f32.mrb[0].mxu0
        %v1093 = vpop.f32.mrb[0].mxu0
        %v1094 = vadd.f32 0.0, %v1093
        %v1095 = vpop.f32.mrb[0].mxu0
        %1096 = vmatprep.mubr.bf16.mxu0 0
        %1097 = vmatmul.mubr.bf16.gmra.mrb[0].mxu0 %v1054
        %v1098 = vpop.f32.mrb[0].mxu0
        %v1099 = vadd.f32 0.0, %v1098
        %v1100 = vpop.f32.mrb[0].mxu0
        %v1101 = vpop.f32.mrb[0].mxu0
        %v1102 = vadd.f32 0.0, %v1101
        %v1103 = vpop.f32.mrb[0].mxu0
        %1104 = vdwg.mxu0
        %v1105 = vsel %vm673, %v1091, -inf
        %1106 = vmax.xlane.f32.xlu0 %v1105
        %v1107 = vpop.xlane.xlu0 %1106
        %v1108 = vsel %vm673, %v1094, -inf
        %1109 = vmax.xlane.f32.xlu0 %v1108
        %v1110 = vpop.xlane.xlu0 %1109
        %v1111 = vsel %vm673, %v1099, -inf
        %1112 = vmax.xlane.f32.xlu0 %v1111
        %v1113 = vpop.xlane.xlu0 %1112
        %v1114 = vsel %vm673, %v1102, -inf
        %1115 = vmax.xlane.f32.xlu0 %v1114
        %v1116 = vpop.xlane.xlu0 %1115
        %v1117 = vsub.f32 %v1091, %v1107
        %v1118 = vsub.f32 %v1094, %v1110
        %v1119 = vsub.f32 %v1099, %v1113
        %v1120 = vsub.f32 %v1102, %v1116
        %v1121 = vpack.c.bf16 %v1118, %v1117
        %v1122 = vpack.c.bf16 %v1120, %v1119
        %v1124 = vmul.bf16 %v1121, 1069105081
        %v1125 = vpow.bf16.pop %v1124
        %v1127 = vmul.bf16 %v1122, 1069105081
        %v1128 = vpow.bf16.pop %v1127
        %v1130 = vsel %vm673, %v1125, 0
        %v1133 = vsel %vm673, %v1128, 0
        %1135 = vmatprep.subr.bf16.mxu0 0
        %1136 = vmatpush1.bf16.xpose.msra.mxu0 %v1130
        %1137 = vmatprep.subr.bf16.mxu0 0
        %1138 = vmatpush1.bf16.xpose.msra.mxu0 %v1133
        %1139 = vmatprep.subr.bf16.mxu0 0
        %1140 = vmatpush1.bf16.xpose.msra.mxu0 0
        %1141 = vmatprep.subr.bf16.mxu0 0
        %1142 = vmatpush1.bf16.xpose.msra.mxu0 0
        %1143 = vmatprep.subr.bf16.mxu0 0
        %1144 = vmatpush1.bf16.xpose.msra.mxu0 0
        %1145 = vmatprep.subr.bf16.mxu0 0
        %1146 = vmatpush1.bf16.xpose.msra.mxu0 0
        %1147 = vmatprep.subr.bf16.mxu0 0
        %1148 = vmatpush1.bf16.xpose.msra.mxu0 0
        %1149 = vmatprep.subr.bf16.mxu0 0
        %1150 = vmatpush1.bf16.xpose.msra.mxu0 0
        %1151 = vmatprep.subr.bf16.mxu0 0
        %1152 = vmatpush1.bf16.xpose.msra.mxu0 0
        %1153 = vmatprep.subr.bf16.mxu0 0
        %1154 = vmatpush1.bf16.xpose.msra.mxu0 0
        %1155 = vmatprep.subr.bf16.mxu0 0
        %1156 = vmatpush1.bf16.xpose.msra.mxu0 0
        %1157 = vmatprep.subr.bf16.mxu0 0
        %1158 = vmatpush1.bf16.xpose.msra.mxu0 0
        %1159 = vmatprep.subr.bf16.mxu0 0
        %1160 = vmatpush1.bf16.xpose.msra.mxu0 0
        %1161 = vmatprep.subr.bf16.mxu0 0
        %1162 = vmatpush1.bf16.xpose.msra.mxu0 0
        %1163 = vmatprep.subr.bf16.mxu0 0
        %1164 = vmatpush1.bf16.xpose.msra.mxu0 0
        %1165 = vmatprep.subr.bf16.mxu0 0
        %1166 = vmatpush1.bf16.xpose.msra.mxu0 0
        %1167 = vmatprep.mubr.bf16.mxu0 0
        %1168 = vmatmul.mubr.bf16.gmra.mrb[0].mxu0 %v699
        %v1169 = vpop.f32.mrb[0].mxu0
        %v1170 = vadd.f32 0.0, %v1169
        %v1171 = vpop.f32.mrb[0].mxu0
        %v1172 = vpop.f32.mrb[0].mxu0
        %v1173 = vpop.f32.mrb[0].mxu0
        %1174 = vdwg.mxu0
        %v1176 = vsel %vm673, %v1033, 0
        %1178 = vmatprep.subr.bf16.mxu0 0
        %1179 = vmatpush1.bf16.xpose.msra.mxu0 %v1130
        %1180 = vmatprep.subr.bf16.mxu0 0
        %1181 = vmatpush1.bf16.xpose.msra.mxu0 %v1133
        %1182 = vmatprep.subr.bf16.mxu0 0
        %1183 = vmatpush1.bf16.xpose.msra.mxu0 0
        %1184 = vmatprep.subr.bf16.mxu0 0
        %1185 = vmatpush1.bf16.xpose.msra.mxu0 0
        %1186 = vmatprep.subr.bf16.mxu0 0
        %1187 = vmatpush1.bf16.xpose.msra.mxu0 0
        %1188 = vmatprep.subr.bf16.mxu0 0
        %1189 = vmatpush1.bf16.xpose.msra.mxu0 0
        %1190 = vmatprep.subr.bf16.mxu0 0
        %1191 = vmatpush1.bf16.xpose.msra.mxu0 0
        %1192 = vmatprep.subr.bf16.mxu0 0
        %1193 = vmatpush1.bf16.xpose.msra.mxu0 0
        %1194 = vmatprep.subr.bf16.mxu0 0
        %1195 = vmatpush1.bf16.xpose.msra.mxu0 0
        %1196 = vmatprep.subr.bf16.mxu0 0
        %1197 = vmatpush1.bf16.xpose.msra.mxu0 0
        %1198 = vmatprep.subr.bf16.mxu0 0
        %1199 = vmatpush1.bf16.xpose.msra.mxu0 0
        %1200 = vmatprep.subr.bf16.mxu0 0
        %1201 = vmatpush1.bf16.xpose.msra.mxu0 0
        %1202 = vmatprep.subr.bf16.mxu0 0
        %1203 = vmatpush1.bf16.xpose.msra.mxu0 0
        %1204 = vmatprep.subr.bf16.mxu0 0
        %1205 = vmatpush1.bf16.xpose.msra.mxu0 0
        %1206 = vmatprep.subr.bf16.mxu0 0
        %1207 = vmatpush1.bf16.xpose.msra.mxu0 0
        %1208 = vmatprep.subr.bf16.mxu0 0
        %1209 = vmatpush1.bf16.xpose.msra.mxu0 0
        %1210 = vmatprep.mubr.bf16.mxu0 0
        %1211 = vmatmul.mubr.bf16.gmra.mrb[0].mxu0 %v1176
        %v1212 = vpop.f32.mrb[0].mxu0
        %v1213 = vadd.f32 0.0, %v1212
        %v1214 = vpop.f32.mrb[0].mxu0
        %v1215 = vpop.f32.mrb[0].mxu0
        %v1216 = vadd.f32 0.0, %v1215
        %v1217 = vpop.f32.mrb[0].mxu0
        %1218 = vdwg.mxu0
        %v1219 = vrcp.pop %v1170
        %v1220 = vlaneseq
        %v1221 = vshrl.u32 %v1220, 7
        %v1222 = vsub.s32 0, %v1221
        %v1223 = vrot.slane %v1219, %v1222
        %v1224 = vmul.f32 %v1213, %v1223
        %v1225 = vmul.f32 %v1216, %v1223
        %v1226 = vpack.c.bf16 %v1225, %v1224
        %s1227 = smul.addr %s1019, 8
        %s1228 = scalar_lea.vmem [#allocation3], %s1227
        %1229 = vst.msk [vmem:[%s1228] sm:$0xff] %vm673, %v1226
        %s1230 = sadd.s32 %s583, 48
        %s1231 = sadd.s32 %s583, 112
        %s1232 = sadd.s32 %s583, 176
        %s1233 = sshra.s32 %s1230, 4
        %s1234 = sand.u32 %s1230, 15
        %s1235 = smul.addr %s1233, 8
        %s1236 = scalar_lea.vmem [#allocation2], %s1235
        %v1237 = vld [vmem:[%s1236] sm:$0xff]
        %s1238 = sshra.s32 %s1231, 4
        %s1239 = sand.u32 %s1231, 15
        %s1240 = smul.addr %s1238, 8
        %s1241 = scalar_lea.vmem [#allocation2], %s1240
        %v1242 = vld [vmem:[%s1241] sm:$0xff]
        %s1243 = sshra.s32 %s1232, 4
        %s1244 = sand.u32 %s1232, 15
        %s1245 = smul.addr %s1243, 8
        %s1246 = scalar_lea.vmem [#allocation2], %s1245
        %v1247 = vld [vmem:[%s1246] sm:$0xff]
        %1248 = vxpose.xlu0.c.b16.start [1/8] %v1237, 128
        %1249 = vxpose.xlu0.c.b16.cont [2/8] 0, 128
        %1250 = vxpose.xlu0.c.b16.cont [3/8] 0, 128
        %1251 = vxpose.xlu0.c.b16.cont [4/8] 0, 128
        %1252 = vxpose.xlu0.c.b16.cont [5/8] 0, 128
        %1253 = vxpose.xlu0.c.b16.cont [6/8] 0, 128
        %1254 = vxpose.xlu0.c.b16.cont [7/8] 0, 128
        %1255 = vxpose.xlu0.c.b16.end [8/8] 0, 128
        %v1256 = vpop.trf.xlu0
        %v1257 = vpop.trf.xlu0
        %v1258 = vpop.trf.xlu0
        %v1259 = vpop.trf.xlu0
        %v1260 = vpop.trf.xlu0
        %v1261 = vpop.trf.xlu0
        %v1262 = vpop.trf.xlu0
        %v1263 = vpop.trf.xlu0
        %v1265 = vsel %vm617, %v1256, 0
        %v1268 = vsel %vm617, %v1257, 0
        %1270 = vmatprep.subr.bf16.mxu0 0
        %1271 = vmatpush1.bf16.msra.mxu0 %v1242
        %1272 = vmatprep.subr.bf16.mxu0 0
        %1273 = vmatpush1.bf16.msra.mxu0 0
        %1274 = vmatprep.subr.bf16.mxu0 0
        %1275 = vmatpush1.bf16.msra.mxu0 0
        %1276 = vmatprep.subr.bf16.mxu0 0
        %1277 = vmatpush1.bf16.msra.mxu0 0
        %1278 = vmatprep.subr.bf16.mxu0 0
        %1279 = vmatpush1.bf16.msra.mxu0 0
        %1280 = vmatprep.subr.bf16.mxu0 0
        %1281 = vmatpush1.bf16.msra.mxu0 0
        %1282 = vmatprep.subr.bf16.mxu0 0
        %1283 = vmatpush1.bf16.msra.mxu0 0
        %1284 = vmatprep.subr.bf16.mxu0 0
        %1285 = vmatpush1.bf16.msra.mxu0 0
        %1286 = vmatprep.subr.bf16.mxu0 0
        %1287 = vmatpush1.bf16.msra.mxu0 0
        %1288 = vmatprep.subr.bf16.mxu0 0
        %1289 = vmatpush1.bf16.msra.mxu0 0
        %1290 = vmatprep.subr.bf16.mxu0 0
        %1291 = vmatpush1.bf16.msra.mxu0 0
        %1292 = vmatprep.subr.bf16.mxu0 0
        %1293 = vmatpush1.bf16.msra.mxu0 0
        %1294 = vmatprep.subr.bf16.mxu0 0
        %1295 = vmatpush1.bf16.msra.mxu0 0
        %1296 = vmatprep.subr.bf16.mxu0 0
        %1297 = vmatpush1.bf16.msra.mxu0 0
        %1298 = vmatprep.subr.bf16.mxu0 0
        %1299 = vmatpush1.bf16.msra.mxu0 0
        %1300 = vmatprep.subr.bf16.mxu0 0
        %1301 = vmatpush1.bf16.msra.mxu0 0
        %1302 = vmatprep.mubr.bf16.mxu0 0
        %1303 = vmatmul.mubr.bf16.gmra.mrb[0].mxu0 %v1265
        %v1304 = vpop.f32.mrb[0].mxu0
        %v1305 = vadd.f32 0.0, %v1304
        %v1306 = vpop.f32.mrb[0].mxu0
        %v1307 = vpop.f32.mrb[0].mxu0
        %v1308 = vadd.f32 0.0, %v1307
        %v1309 = vpop.f32.mrb[0].mxu0
        %1310 = vmatprep.mubr.bf16.mxu0 0
        %1311 = vmatmul.mubr.bf16.gmra.mrb[0].mxu0 %v1268
        %v1312 = vpop.f32.mrb[0].mxu0
        %v1313 = vadd.f32 0.0, %v1312
        %v1314 = vpop.f32.mrb[0].mxu0
        %v1315 = vpop.f32.mrb[0].mxu0
        %v1316 = vadd.f32 0.0, %v1315
        %v1317 = vpop.f32.mrb[0].mxu0
        %1318 = vdwg.mxu0
        %v1319 = vsel %vm673, %v1305, -inf
        %1320 = vmax.xlane.f32.xlu0 %v1319
        %v1321 = vpop.xlane.xlu0 %1320
        %v1322 = vsel %vm673, %v1308, -inf
        %1323 = vmax.xlane.f32.xlu0 %v1322
        %v1324 = vpop.xlane.xlu0 %1323
        %v1325 = vsel %vm673, %v1313, -inf
        %1326 = vmax.xlane.f32.xlu0 %v1325
        %v1327 = vpop.xlane.xlu0 %1326
        %v1328 = vsel %vm673, %v1316, -inf
        %1329 = vmax.xlane.f32.xlu0 %v1328
        %v1330 = vpop.xlane.xlu0 %1329
        %v1331 = vsub.f32 %v1305, %v1321
        %v1332 = vsub.f32 %v1308, %v1324
        %v1333 = vsub.f32 %v1313, %v1327
        %v1334 = vsub.f32 %v1316, %v1330
        %v1335 = vpack.c.bf16 %v1332, %v1331
        %v1336 = vpack.c.bf16 %v1334, %v1333
        %v1338 = vmul.bf16 %v1335, 1069105081
        %v1339 = vpow.bf16.pop %v1338
        %v1341 = vmul.bf16 %v1336, 1069105081
        %v1342 = vpow.bf16.pop %v1341
        %v1344 = vsel %vm673, %v1339, 0
        %v1347 = vsel %vm673, %v1342, 0
        %1349 = vmatprep.subr.bf16.mxu0 0
        %1350 = vmatpush1.bf16.xpose.msra.mxu0 %v1344
        %1351 = vmatprep.subr.bf16.mxu0 0
        %1352 = vmatpush1.bf16.xpose.msra.mxu0 %v1347
        %1353 = vmatprep.subr.bf16.mxu0 0
        %1354 = vmatpush1.bf16.xpose.msra.mxu0 0
        %1355 = vmatprep.subr.bf16.mxu0 0
        %1356 = vmatpush1.bf16.xpose.msra.mxu0 0
        %1357 = vmatprep.subr.bf16.mxu0 0
        %1358 = vmatpush1.bf16.xpose.msra.mxu0 0
        %1359 = vmatprep.subr.bf16.mxu0 0
        %1360 = vmatpush1.bf16.xpose.msra.mxu0 0
        %1361 = vmatprep.subr.bf16.mxu0 0
        %1362 = vmatpush1.bf16.xpose.msra.mxu0 0
        %1363 = vmatprep.subr.bf16.mxu0 0
        %1364 = vmatpush1.bf16.xpose.msra.mxu0 0
        %1365 = vmatprep.subr.bf16.mxu0 0
        %1366 = vmatpush1.bf16.xpose.msra.mxu0 0
        %1367 = vmatprep.subr.bf16.mxu0 0
        %1368 = vmatpush1.bf16.xpose.msra.mxu0 0
        %1369 = vmatprep.subr.bf16.mxu0 0
        %1370 = vmatpush1.bf16.xpose.msra.mxu0 0
        %1371 = vmatprep.subr.bf16.mxu0 0
        %1372 = vmatpush1.bf16.xpose.msra.mxu0 0
        %1373 = vmatprep.subr.bf16.mxu0 0
        %1374 = vmatpush1.bf16.xpose.msra.mxu0 0
        %1375 = vmatprep.subr.bf16.mxu0 0
        %1376 = vmatpush1.bf16.xpose.msra.mxu0 0
        %1377 = vmatprep.subr.bf16.mxu0 0
        %1378 = vmatpush1.bf16.xpose.msra.mxu0 0
        %1379 = vmatprep.subr.bf16.mxu0 0
        %1380 = vmatpush1.bf16.xpose.msra.mxu0 0
        %1381 = vmatprep.mubr.bf16.mxu0 0
        %1382 = vmatmul.mubr.bf16.gmra.mrb[0].mxu0 %v699
        %v1383 = vpop.f32.mrb[0].mxu0
        %v1384 = vadd.f32 0.0, %v1383
        %v1385 = vpop.f32.mrb[0].mxu0
        %v1386 = vpop.f32.mrb[0].mxu0
        %v1387 = vpop.f32.mrb[0].mxu0
        %1388 = vdwg.mxu0
        %v1390 = vsel %vm673, %v1247, 0
        %1392 = vmatprep.subr.bf16.mxu0 0
        %1393 = vmatpush1.bf16.xpose.msra.mxu0 %v1344
        %1394 = vmatprep.subr.bf16.mxu0 0
        %1395 = vmatpush1.bf16.xpose.msra.mxu0 %v1347
        %1396 = vmatprep.subr.bf16.mxu0 0
        %1397 = vmatpush1.bf16.xpose.msra.mxu0 0
        %1398 = vmatprep.subr.bf16.mxu0 0
        %1399 = vmatpush1.bf16.xpose.msra.mxu0 0
        %1400 = vmatprep.subr.bf16.mxu0 0
        %1401 = vmatpush1.bf16.xpose.msra.mxu0 0
        %1402 = vmatprep.subr.bf16.mxu0 0
        %1403 = vmatpush1.bf16.xpose.msra.mxu0 0
        %1404 = vmatprep.subr.bf16.mxu0 0
        %1405 = vmatpush1.bf16.xpose.msra.mxu0 0
        %1406 = vmatprep.subr.bf16.mxu0 0
        %1407 = vmatpush1.bf16.xpose.msra.mxu0 0
        %1408 = vmatprep.subr.bf16.mxu0 0
        %1409 = vmatpush1.bf16.xpose.msra.mxu0 0
        %1410 = vmatprep.subr.bf16.mxu0 0
        %1411 = vmatpush1.bf16.xpose.msra.mxu0 0
        %1412 = vmatprep.subr.bf16.mxu0 0
        %1413 = vmatpush1.bf16.xpose.msra.mxu0 0
        %1414 = vmatprep.subr.bf16.mxu0 0
        %1415 = vmatpush1.bf16.xpose.msra.mxu0 0
        %1416 = vmatprep.subr.bf16.mxu0 0
        %1417 = vmatpush1.bf16.xpose.msra.mxu0 0
        %1418 = vmatprep.subr.bf16.mxu0 0
        %1419 = vmatpush1.bf16.xpose.msra.mxu0 0
        %1420 = vmatprep.subr.bf16.mxu0 0
        %1421 = vmatpush1.bf16.xpose.msra.mxu0 0
        %1422 = vmatprep.subr.bf16.mxu0 0
        %1423 = vmatpush1.bf16.xpose.msra.mxu0 0
        %1424 = vmatprep.mubr.bf16.mxu0 0
        %1425 = vmatmul.mubr.bf16.gmra.mrb[0].mxu0 %v1390
        %v1426 = vpop.f32.mrb[0].mxu0
        %v1427 = vadd.f32 0.0, %v1426
        %v1428 = vpop.f32.mrb[0].mxu0
        %v1429 = vpop.f32.mrb[0].mxu0
        %v1430 = vadd.f32 0.0, %v1429
        %v1431 = vpop.f32.mrb[0].mxu0
        %1432 = vdwg.mxu0
        %v1433 = vrcp.pop %v1384
        %v1434 = vlaneseq
        %v1435 = vshrl.u32 %v1434, 7
        %v1436 = vsub.s32 0, %v1435
        %v1437 = vrot.slane %v1433, %v1436
        %v1438 = vmul.f32 %v1427, %v1437
        %v1439 = vmul.f32 %v1430, %v1437
        %v1440 = vpack.c.bf16 %v1439, %v1438
        %s1441 = smul.addr %s1233, 8
        %s1442 = scalar_lea.vmem [#allocation3], %s1441
        %1443 = vst.msk [vmem:[%s1442] sm:$0xff] %vm673, %v1440
        // Predicated region
        $region57: #{tpu_custom_call.1} parent=35 // pred_check
          %p1444 = pneg %p272
        $region58: #{tpu_custom_call.1} parent=35 // pred_check_branch
          %1446 = sbr.rel (%p1444) target = $region60
        $region59: #{tpu_custom_call.1} parent=35 // pred_region
          %v1447 = vld [vmem:[#allocation3] sm:$0xff]
          %v1448 = vld [vmem:[#allocation3 + $0x8] sm:$0xff]
          %v1449 = vld [vmem:[#allocation3 + $0x10] sm:$0xff]
          %v1450 = vld [vmem:[#allocation3 + $0x18] sm:$0xff]
          %v1451 = vld [vmem:[#allocation9] sm:$0xf]
          %v1452 = vld [vmem:[#allocation9 + $0x4] sm:$0xf]
          %v1453 = vld [vmem:[#allocation9 + $0x8] sm:$0xf]
          %v1454 = vld [vmem:[#allocation9 + $0xc] sm:$0xf]
          %v1455 = vld [vmem:[#allocation9 + $0x10] sm:$0xf]
          %v1456 = vld [vmem:[#allocation9 + $0x14] sm:$0xf]
          %v1457 = vld [vmem:[#allocation9 + $0x18] sm:$0xf]
          %v1458 = vld [vmem:[#allocation9 + $0x1c] sm:$0xf]
          %v1459 = vld [vmem:[#allocation10] sm:$0x1]
          %v1461 = vlaneseq
          %v1462 = vshrl.u32 %v1461, 7
          %v1463 = vsub.s32 0, %v1462
          %v1464 = vrot.slane %v1459, %v1463
          %1466 = vxpose.xlu0.c.b16.start [1/8] %v1447, 128
          %1467 = vxpose.xlu0.c.b16.cont [2/8] %v1448, 128
          %1468 = vxpose.xlu0.c.b16.cont [3/8] %v1449, 128
          %1469 = vxpose.xlu0.c.b16.cont [4/8] %v1450, 128
          %1470 = vxpose.xlu0.c.b16.cont [5/8] 0, 128
          %1471 = vxpose.xlu0.c.b16.cont [6/8] 0, 128
          %1472 = vxpose.xlu0.c.b16.cont [7/8] 0, 128
          %1473 = vxpose.xlu0.c.b16.end [8/8] 0, 128
          %v1474 = vpop.trf.xlu0
          %v1475 = vpop.trf.xlu0
          %v1476 = vpop.trf.xlu0
          %v1477 = vpop.trf.xlu0
          %v1478 = vpop.trf.xlu0
          %v1479 = vpop.trf.xlu0
          %v1480 = vpop.trf.xlu0
          %v1481 = vpop.trf.xlu0
          %v1490 = vunpack.c.l.b16 %v1451
          %v1491 = vunpack.c.l.b16 %v1452
          %v1492 = vunpack.c.l.b16 %v1453
          %v1493 = vunpack.c.l.b16 %v1454
          %v1494 = vunpack.c.l.b16 %v1455
          %v1495 = vunpack.c.l.b16 %v1456
          %v1496 = vunpack.c.l.b16 %v1457
          %v1497 = vunpack.c.l.b16 %v1458
          %v1498 = vpack.c.b16 %v1491, %v1490
          %v1499 = vpack.c.b16 %v1493, %v1492
          %v1500 = vpack.c.b16 %v1495, %v1494
          %v1501 = vpack.c.b16 %v1497, %v1496
          %vm1506 = vcmask 523264
          %v1508 = vsel %vm1506, %v1474, 0
          %v1511 = vsel %vm1506, %v1475, 0
          %1513 = vmatprep.subr.bf16.mxu0 0
          %1514 = vmatpush1.bf16.msra.mxu0 %v1498
          %1515 = vmatprep.subr.bf16.mxu0 0
          %1516 = vmatpush1.bf16.msra.mxu0 %v1499
          %1517 = vmatprep.subr.bf16.mxu0 0
          %1518 = vmatpush1.bf16.msra.mxu0 %v1500
          %1519 = vmatprep.subr.bf16.mxu0 0
          %1520 = vmatpush1.bf16.msra.mxu0 %v1501
          %1521 = vmatprep.subr.bf16.mxu0 0
          %1522 = vmatpush1.bf16.msra.mxu0 0
          %1523 = vmatprep.subr.bf16.mxu0 0
          %1524 = vmatpush1.bf16.msra.mxu0 0
          %1525 = vmatprep.subr.bf16.mxu0 0
          %1526 = vmatpush1.bf16.msra.mxu0 0
          %1527 = vmatprep.subr.bf16.mxu0 0
          %1528 = vmatpush1.bf16.msra.mxu0 0
          %1529 = vmatprep.subr.bf16.mxu0 0
          %1530 = vmatpush1.bf16.msra.mxu0 0
          %1531 = vmatprep.subr.bf16.mxu0 0
          %1532 = vmatpush1.bf16.msra.mxu0 0
          %1533 = vmatprep.subr.bf16.mxu0 0
          %1534 = vmatpush1.bf16.msra.mxu0 0
          %1535 = vmatprep.subr.bf16.mxu0 0
          %1536 = vmatpush1.bf16.msra.mxu0 0
          %1537 = vmatprep.subr.bf16.mxu0 0
          %1538 = vmatpush1.bf16.msra.mxu0 0
          %1539 = vmatprep.subr.bf16.mxu0 0
          %1540 = vmatpush1.bf16.msra.mxu0 0
          %1541 = vmatprep.subr.bf16.mxu0 0
          %1542 = vmatpush1.bf16.msra.mxu0 0
          %1543 = vmatprep.subr.bf16.mxu0 0
          %1544 = vmatpush1.bf16.msra.mxu0 0
          %1545 = vmatprep.mubr.bf16.mxu0 0
          %1546 = vmatmul.mubr.bf16.gmra.mrb[0].mxu0 %v1508
          %v1547 = vpop.f32.mrb[0].mxu0
          %v1548 = vadd.f32 %v1464, %v1547
          %v1549 = vpop.f32.mrb[0].mxu0
          %v1550 = vpop.f32.mrb[0].mxu0
          %v1551 = vadd.f32 %v1464, %v1550
          %v1552 = vpop.f32.mrb[0].mxu0
          %1553 = vmatprep.mubr.bf16.mxu0 0
          %1554 = vmatmul.mubr.bf16.gmra.mrb[0].mxu0 %v1511
          %v1555 = vpop.f32.mrb[0].mxu0
          %v1556 = vadd.f32 %v1464, %v1555
          %v1557 = vpop.f32.mrb[0].mxu0
          %v1558 = vpop.f32.mrb[0].mxu0
          %v1559 = vadd.f32 %v1464, %v1558
          %v1560 = vpop.f32.mrb[0].mxu0
          %1561 = vdwg.mxu0
          %1562 = vst.msk [vmem:[%s269] sm:$0xff] %vm1506, %v1548
          %1563 = vst.msk [vmem:[%s269 + $0x8] sm:$0xff] %vm1506, %v1551
          %1564 = vst.msk [vmem:[%s269 + $0x10] sm:$0xff] %vm1506, %v1556
          %1565 = vst.msk [vmem:[%s269 + $0x18] sm:$0xff] %vm1506, %v1559
        $region60: #{tpu_custom_call.1} parent=35 // pred_fallthru
          _
        %s1566 = sand.u32 %s132, 1
        %s1567 = scalar_lea.sflag [#allocation6], %s1566
        %s1568 = sand.u32 %s132, 1
        %s1569 = smul.addr %s1568, 32
        %s1570 = scalar_lea.vmem [#allocation12], %s1569
        // Predicated region
        $region61: #{tpu_custom_call.1} parent=35 // pred_check
          %p1571 = pneg %p142
        $region62: #{tpu_custom_call.1} parent=35 // pred_check_branch
          %1573 = sbr.rel (%p1571) target = $region64
        $region63: #{tpu_custom_call.1} parent=35 // pred_region
          %s1575 = ssub.s32 512, 512
          %1576 = vsyncadd %s1567, %s1575
          %s1577 = smul.addr %s27, 4
          %s1578 = smul.addr %s1577, 128
          %s1579 = scalar_lea.hbm %s4, %s1578
          %s1580 = sshll.u32 %s1570, 4
          %s1581 = int_to_ptr.vmem [resolvable:$true] %s1580
          %1586 = dma.vmem_to_hbm [thread:$0]  %s1581, 512, %s1579, %s1567, 128, 128, 8
        $region64: #{tpu_custom_call.1} parent=35 // pred_fallthru
          _
      $region36: #{tpu_custom_call.1} parent=5 // pred_fallthru
        _
      %p1587 = scmp.le.s32.totalorder 2, %s18
      // Predicated region
      $region65: #{tpu_custom_call.1} parent=5 // pred_check
        %p1588 = pneg %p1587
      $region66: #{tpu_custom_call.1} parent=5 // pred_check_branch
        %1590 = sbr.rel (%p1588) target = $region68
      $region67: #{tpu_custom_call.1} parent=5 // pred_region
        %s1591 = ssub.s32 %s18, 2
        // Predicated region
        $region69: #{tpu_custom_call.1} parent=67 // pred_check
          %p1592 = pneg %p148
        $region70: #{tpu_custom_call.1} parent=67 // pred_check_branch
          %1594 = sbr.rel (%p1592) target = $region72
        $region71: #{tpu_custom_call.1} parent=67 // pred_region
          %s1595 = sand.u32 %s133, 1
          %s1596 = scalar_lea.sflag [#allocation6], %s1595
          %s1597 = sand.u32 %s133, 1
          %s1598 = smul.addr %s1597, 32
          %s1599 = scalar_lea.vmem [#allocation12], %s1598
          %1600 = dma.done %s1596, 512
        $region72: #{tpu_custom_call.1} parent=67 // pred_fallthru
          _
      $region68: #{tpu_custom_call.1} parent=5 // pred_fallthru
        _
    $region6: #{tpu_custom_call.1} parent=1 // loop_footer
      %s22 = sadd.s32 1, %s18
    $region7: #{tpu_custom_call.1} parent=1 // loop_footer_branch
      %17 = sbr.rel target = $region3
    $region8: #{tpu_custom_call.1} parent=1 // loop_exit
      _
    %1601 = vsyncpa [#allocation5], 1
    %s1602 = scalar_lea.sflag [#allocation5], 1
    %1603 = vsyncpa %s1602, 1
    %1604 = vsyncpa [#allocation8], 1
    %1605 = vsyncpa [#allocation11], 1
    %1606 = vsyncpa [#allocation6], 1
    %s1607 = scalar_lea.sflag [#allocation6], 1
    %1608 = vsyncpa %s1607, 1

</llo_original>
